<compile_context>
chip_gen: v7x
topology: tpu7x:2x2x1
jax: 0.10.0
libtpu: 0.0.40
codegen_flags: <defaults>
</compile_context>

<pallas_src>
import functools
import math

import jax
import jax.numpy as jnp
from jax.experimental import pallas as pl
from jax.experimental.pallas import tpu as pltpu


def _cheb_kernel(x_ref, gso_ref, gso2_ref, w_ref, b_ref, o_ref, *, Ks):
    # x_ref:   (1, N, TB*C_in)        wide slab, compute dtype (bf16 or f32)
    # gso_ref: (N, N)                 graph shift operator (resident)
    # gso2_ref:(N, N)                 2 * gso (resident, hoisted scale)
    # w_ref:   (Ks, TB*C_in, TB*C_out) block-diagonal kron(I_TB, W[k]) weights
    # b_ref:   (1, TB*C_out)          bias pre-broadcast over the TB columns (f32)
    # o_ref:   (1, N, TB*C_out)
    x0 = x_ref[0]                                           # (N, TB*C_in)
    cd = x0.dtype                                           # MXU input dtype

    # Weight stage stays in the wide layout via the block-diagonal weights, so
    # there is no reshape/concat relayout; accumulate per order in f32.
    acc = jnp.dot(x0, w_ref[0], preferred_element_type=jnp.float32)

    if Ks >= 2:
        x1 = jnp.dot(gso_ref[...], x0, preferred_element_type=jnp.float32)
        acc = acc + jnp.dot(x1.astype(cd), w_ref[1],
                            preferred_element_type=jnp.float32)
        if Ks >= 3:
            gso2 = gso2_ref[...]                            # resident 2*gso
            xkm2 = x0.astype(jnp.float32)
            xkm1 = x1
            for k in range(2, Ks):                          # static unroll
                xk = (jnp.dot(gso2, xkm1.astype(cd),
                              preferred_element_type=jnp.float32) - xkm2)
                acc = acc + jnp.dot(xk.astype(cd), w_ref[k],
                                    preferred_element_type=jnp.float32)
                xkm2, xkm1 = xkm1, xk

    o_ref[0] = (acc + b_ref[...]).astype(o_ref.dtype)


def _round_up(x, m):
    return ((x + m - 1) // m) * m


def _vmem_budget_bytes():
    """Generation-aware VMEM budget (v7x: 64 MiB physical; v5e/v6e: 128 MiB)."""
    cap = 64 * 1024 * 1024
    try:
        cap = int(pltpu.get_tpu_info().vmem_capacity_bytes)
    except Exception:
        pass
    # Leave headroom for Mosaic internal scratch / semaphores / spill slack.
    return max(16 * 1024 * 1024, min(cap * 3 // 4, cap - 16 * 1024 * 1024))


def _choose_block_bt(BT, N, C_in, C_out, Ks, itemsize, budget_bytes):
    """How many (b, t) columns each grid step packs into one wide slab."""
    # Keep both TB*C_in and TB*C_out multiples of 128 lanes (unmasked vld/vst)...
    lane_mult = math.lcm(128 // math.gcd(C_in, 128), 128 // math.gcd(C_out, 128))
    # ...and target >=512-lane slabs to amortize the ~0.35us/step pipeline
    # overhead and fill the 256-wide MXU, when there is enough work.
    target = _round_up(max(pl.cdiv(512, C_in), pl.cdiv(512, C_out)), lane_mult)
    tb = min(target, _round_up(BT, lane_mult))

    def vmem_estimate(t):
        x_blocks = 2 * N * t * C_in * itemsize                 # double-buffered in
        o_blocks = 2 * N * t * C_out * 4                       # double-buffered out
        temps = 4 * N * t * C_in * 4 + 2 * N * t * C_out * 4   # recurrence + acc
        wblk = Ks * (t * C_in) * (t * C_out) * itemsize        # block-diag W (x1)
        gso = 2 * N * N * itemsize                             # gso + 2*gso (x1)
        return x_blocks + o_blocks + temps + wblk + gso

    while tb > lane_mult and vmem_estimate(tb) > budget_bytes:
        tb = max(lane_mult, _round_up(tb // 2, lane_mult))
    # NOTE: for very large graphs even tb == lane_mult may exceed the budget;
    # that regime needs an N-tiled variant (second grid axis over node blocks
    # with an accumulator scratch), which this kernel does not implement.
    return max(int(tb), 1)


def _const_index_map(ndim):
    return lambda i: (0,) * ndim


def cheb_graph_conv(x, gso, weight, bias=None, *, block_bt=None,
                    compute_dtype=jnp.bfloat16):
    """x: (B, C_in, T, N); gso: (N, N); weight: (Ks, C_in, C_out);
    bias: (C_out,) or None. Returns (B, T, N, C_out) float32."""
    B, C_in, T, N = x.shape
    Ks, _, C_out = weight.shape
    BT = B * T
    itemsize = jnp.dtype(compute_dtype).itemsize

    budget = _vmem_budget_bytes()
    TB = block_bt if block_bt is not None else _choose_block_bt(
        BT, N, C_in, C_out, Ks, itemsize, budget)
    G = pl.cdiv(BT, TB)
    BT_pad = G * TB

    # ---- wrapper glue (layout plumbing; XLA fuses each chain into one copy) --
    # (b, t) columns are interleaved with channels into a single wide lane axis
    # so every in-kernel op is lane-dense. Padded columns only ever hold zeros
    # (-> bias values) and are sliced off below.
    x_btnc = jnp.transpose(x, (0, 2, 3, 1)).astype(compute_dtype)  # (B,T,N,C_in)
    x_btnc = x_btnc.reshape(BT, N, C_in)
    if BT_pad != BT:
        x_btnc = jnp.pad(x_btnc, ((0, BT_pad - BT), (0, 0), (0, 0)))
    x_in = (x_btnc.reshape(G, TB, N, C_in)
                  .transpose(0, 2, 1, 3)
                  .reshape(G, N, TB * C_in))

    gso_f32 = gso.astype(jnp.float32)
    gso_c = gso_f32.astype(compute_dtype)
    gso2_c = (2.0 * gso_f32).astype(compute_dtype)

    # Block-diagonal weights Wblk_k = kron(I_TB, W[k]) keep the weight
    # contraction in the wide layout with zero in-kernel relayout.
    eye = jnp.eye(TB, dtype=jnp.float32)
    wblk = (jnp.einsum('ts,kij->ktisj', eye, weight.astype(jnp.float32))
               .reshape(Ks, TB * C_in, TB * C_out)
               .astype(compute_dtype))

    if bias is None:
        bias_wide = jnp.zeros((1, TB * C_out), dtype=jnp.float32)
    else:
        bias_wide = jnp.tile(bias.astype(jnp.float32).reshape(1, C_out), (1, TB))

    flops = G * (2 * N * N * TB * C_in * max(Ks - 1, 0)
                 + 2 * N * (TB * C_in) * (TB * C_out) * Ks
                 + 2 * N * TB * C_in * max(Ks - 2, 0))
    bytes_accessed = (x_in.size * itemsize + G * N * TB * C_out * 4
                      + 2 * N * N * itemsize + wblk.size * itemsize
                      + bias_wide.size * 4)
    cost = pl.CostEstimate(flops=int(flops), transcendentals=0,
                           bytes_accessed=int(bytes_accessed))

    kernel = functools.partial(_cheb_kernel, Ks=Ks)
    out_shape = jax.ShapeDtypeStruct((G, N, TB * C_out), jnp.float32)

    def build_and_run(single_buffer_invariants):
        def const_spec(block_shape):
            index_map = _const_index_map(len(block_shape))
            if single_buffer_invariants:
                # Grid-invariant operands: one VMEM buffer instead of two.
                return pl.BlockSpec(block_shape, index_map,
                                    pipeline_mode=pl.Buffered(1))
            return pl.BlockSpec(block_shape, index_map)

        grid_spec = pltpu.PrefetchScalarGridSpec(
            num_scalar_prefetch=0,
            grid=(G,),
            in_specs=[
                pl.BlockSpec((1, N, TB * C_in), lambda i: (i, 0, 0)),
                const_spec((N, N)),
                const_spec((N, N)),
                const_spec((Ks, TB * C_in, TB * C_out)),
                const_spec((1, TB * C_out)),
            ],
            out_specs=pl.BlockSpec((1, N, TB * C_out), lambda i: (i, 0, 0)),
        )
        return pl.pallas_call(
            kernel,
            out_shape=out_shape,
            grid_spec=grid_spec,
            compiler_params=pltpu.CompilerParams(
                # Slabs are independent -> "parallel" lets v7x shard the grid
                # over both TensorCores when G > 1; on 1-TC v5e/v6e the grid is
                # a serial loop, so we never split slabs just to add steps.
                dimension_semantics=("parallel",),
                vmem_limit_bytes=int(budget),
            ),
            cost_estimate=cost,
        )(x_in, gso_c, gso2_c, wblk, bias_wide)

    if hasattr(pl, "Buffered"):
        try:
            out = build_and_run(True)
        except Exception:
            # Older jax without BlockSpec pipeline_mode support.
            out = build_and_run(False)
    else:
        out = build_and_run(False)

    # Undo the wide layout: (G, N, TB*C_out) -> (B, T, N, C_out).
    out = (out.reshape(G, N, TB, C_out)
              .transpose(0, 2, 1, 3)
              .reshape(BT_pad, N, C_out)[:BT]
              .reshape(B, T, N, C_out))
    return out


def _reference(x, gso, weight, bias):
    # Pure-JAX reference mirroring the PyTorch einsum chain (f32).
    Ks = weight.shape[0]
    xp = jnp.transpose(x, (0, 2, 3, 1)).astype(jnp.float32)     # (B, T, N, C_in)
    x_list = [xp]
    if Ks >= 2:
        x_list.append(jnp.einsum('hi,btij->bthj', gso, xp))
        for k in range(2, Ks):
            x_list.append(jnp.einsum('hi,btij->bthj', 2.0 * gso, x_list[k - 1])
                          - x_list[k - 2])
    xs = jnp.stack(x_list, axis=2)                              # (B, T, K, N, C_in)
    out = jnp.einsum('btkhi,kij->bthj', xs, weight)
    if bias is not None:
        out = out + bias
    return out


if __name__ == "__main__":
    B, C_in, C_out, T, N, Ks = 2, 4, 8, 8, 16, 3

    key = jax.random.PRNGKey(0)
    kx, kg, kw, kb = jax.random.split(key, 4)

    x = jax.random.normal(kx, (B, C_in, T, N), dtype=jnp.float32)

    # Symmetric (scaled) graph shift operator, deterministic.
    a = jax.random.uniform(kg, (N, N), dtype=jnp.float32)
    gso = (a + a.T) / (2.0 * N)

    # Deterministic init matching the PyTorch shapes / bounds:
    # kaiming_uniform_(a=sqrt(5)) on (Ks, C_in, C_out): fan_in = C_in * C_out.
    fan_in = C_in * C_out
    bound = 1.0 / math.sqrt(fan_in)
    weight = jax.random.uniform(kw, (Ks, C_in, C_out), dtype=jnp.float32,
                                minval=-bound, maxval=bound)
    bias = jax.random.uniform(kb, (C_out,), dtype=jnp.float32,
                              minval=-bound, maxval=bound)

    ref = _reference(x, gso, weight, bias)

    # f32 MXU path: strict check against the pure-JAX reference.
    out_f32 = jax.block_until_ready(
        cheb_graph_conv(x, gso, weight, bias, compute_dtype=jnp.float32))
    assert out_f32.shape == (B, T, N, C_out)
    assert jnp.allclose(out_f32, ref, atol=1e-4, rtol=1e-4)

    # Default bf16-MXU / f32-accumulate path: looser tolerance (bf16 inputs).
    out_bf16 = jax.block_until_ready(cheb_graph_conv(x, gso, weight, bias))
    assert out_bf16.shape == (B, T, N, C_out)
    assert jnp.allclose(out_bf16, ref, atol=3e-2, rtol=3e-2)

    print("KERNEL_OK")
</pallas_src>

<mosaic_0001>
module attributes {stable_mosaic.version = 11 : i64} {
  func.func @_cheb_kernel(%arg0: i32, %arg1: memref<1x16x128xf32, #tpu.memory_space<vmem>>, %arg2: memref<16x16xf32, #tpu.memory_space<vmem>>, %arg3: memref<16x16xf32, #tpu.memory_space<vmem>>, %arg4: memref<3x128x256xf32, #tpu.memory_space<vmem>>, %arg5: memref<1x256xf32, #tpu.memory_space<vmem>>, %arg6: memref<1x16x256xf32, #tpu.memory_space<vmem>>) attributes {dimension_semantics = [#tpu.dimension_semantics<parallel>], iteration_bounds = array<i64: 1>, scalar_prefetch = 0 : i64, scratch_operands = 0 : i64, tpu.core_type = #tpu.core_type<tc>, window_params = [{transform_indices = @transform_0, window_bounds = array<i64: 1, 16, 128>}, {pipeline_mode = #tpu.pipeline_mode<synchronous>, transform_indices = @transform_1, window_bounds = array<i64: 16, 16>}, {pipeline_mode = #tpu.pipeline_mode<synchronous>, transform_indices = @transform_2, window_bounds = array<i64: 16, 16>}, {pipeline_mode = #tpu.pipeline_mode<synchronous>, transform_indices = @transform_3, window_bounds = array<i64: 3, 128, 256>}, {pipeline_mode = #tpu.pipeline_mode<synchronous>, transform_indices = @transform_4, window_bounds = array<i64: 1, 256>}, {transform_indices = @transform_5, window_bounds = array<i64: 1, 16, 256>}]} {
    %c0 = arith.constant 0 : index
    %c0_0 = arith.constant 0 : index
    %c0_1 = arith.constant 0 : index
    %0 = vector.load %arg1[%c0, %c0_0, %c0_1] : memref<1x16x128xf32, #tpu.memory_space<vmem>>, vector<1x16x128xf32>
    %1 = vector.shape_cast %0 : vector<1x16x128xf32> to vector<16x128xf32>
    %c0_2 = arith.constant 0 : index
    %c0_3 = arith.constant 0 : index
    %c0_4 = arith.constant 0 : index
    %2 = vector.load %arg4[%c0_2, %c0_3, %c0_4] : memref<3x128x256xf32, #tpu.memory_space<vmem>>, vector<1x128x256xf32>
    %3 = vector.shape_cast %2 : vector<1x128x256xf32> to vector<128x256xf32>
    %cst = arith.constant dense<0.000000e+00> : vector<16x256xf32>
    %4 = tpu.matmul %1, %3, %cst {dimension_numbers = #tpu.dot_dimension_numbers<[1], [0], [0], [1], [0, 0, 1, 1], [], []>} : vector<16x128xf32>, vector<128x256xf32>, vector<16x256xf32> -> vector<16x256xf32>
    %c0_5 = arith.constant 0 : index
    %c0_6 = arith.constant 0 : index
    %5 = vector.load %arg2[%c0_5, %c0_6] : memref<16x16xf32, #tpu.memory_space<vmem>>, vector<16x16xf32>
    %cst_7 = arith.constant dense<0.000000e+00> : vector<16x128xf32>
    %6 = tpu.matmul %5, %1, %cst_7 {dimension_numbers = #tpu.dot_dimension_numbers<[1], [0], [0], [1], [0, 0, 1, 1], [], []>} : vector<16x16xf32>, vector<16x128xf32>, vector<16x128xf32> -> vector<16x128xf32>
    %c1 = arith.constant 1 : index
    %c0_8 = arith.constant 0 : index
    %c0_9 = arith.constant 0 : index
    %7 = vector.load %arg4[%c1, %c0_8, %c0_9] : memref<3x128x256xf32, #tpu.memory_space<vmem>>, vector<1x128x256xf32>
    %8 = vector.shape_cast %7 : vector<1x128x256xf32> to vector<128x256xf32>
    %cst_10 = arith.constant dense<0.000000e+00> : vector<16x256xf32>
    %9 = tpu.matmul %6, %8, %cst_10 {dimension_numbers = #tpu.dot_dimension_numbers<[1], [0], [0], [1], [0, 0, 1, 1], [], []>} : vector<16x128xf32>, vector<128x256xf32>, vector<16x256xf32> -> vector<16x256xf32>
    %10 = arith.addf %4, %9 : vector<16x256xf32>
    %c0_11 = arith.constant 0 : index
    %c0_12 = arith.constant 0 : index
    %11 = vector.load %arg3[%c0_11, %c0_12] : memref<16x16xf32, #tpu.memory_space<vmem>>, vector<16x16xf32>
    %cst_13 = arith.constant dense<0.000000e+00> : vector<16x128xf32>
    %12 = tpu.matmul %11, %6, %cst_13 {dimension_numbers = #tpu.dot_dimension_numbers<[1], [0], [0], [1], [0, 0, 1, 1], [], []>} : vector<16x16xf32>, vector<16x128xf32>, vector<16x128xf32> -> vector<16x128xf32>
    %13 = arith.subf %12, %1 : vector<16x128xf32>
    %c2 = arith.constant 2 : index
    %c0_14 = arith.constant 0 : index
    %c0_15 = arith.constant 0 : index
    %14 = vector.load %arg4[%c2, %c0_14, %c0_15] : memref<3x128x256xf32, #tpu.memory_space<vmem>>, vector<1x128x256xf32>
    %15 = vector.shape_cast %14 : vector<1x128x256xf32> to vector<128x256xf32>
    %cst_16 = arith.constant dense<0.000000e+00> : vector<16x256xf32>
    %16 = tpu.matmul %13, %15, %cst_16 {dimension_numbers = #tpu.dot_dimension_numbers<[1], [0], [0], [1], [0, 0, 1, 1], [], []>} : vector<16x128xf32>, vector<128x256xf32>, vector<16x256xf32> -> vector<16x256xf32>
    %17 = arith.addf %10, %16 : vector<16x256xf32>
    %c0_17 = arith.constant 0 : index
    %c0_18 = arith.constant 0 : index
    %18 = vector.load %arg5[%c0_17, %c0_18] : memref<1x256xf32, #tpu.memory_space<vmem>>, vector<1x256xf32>
    %19 = vector.broadcast %18 : vector<1x256xf32> to vector<16x256xf32>
    %20 = arith.addf %17, %19 : vector<16x256xf32>
    %c0_19 = arith.constant 0 : index
    %c0_20 = arith.constant 0 : index
    %c0_21 = arith.constant 0 : index
    %21 = vector.load %arg6[%c0_19, %c0_20, %c0_21] : memref<1x16x256xf32, #tpu.memory_space<vmem>>, vector<1x16x256xf32>
    %22 = vector.shape_cast %21 : vector<1x16x256xf32> to vector<16x256xf32>
    %23 = vector.shape_cast %20 : vector<16x256xf32> to vector<1x16x256xf32>
    tpu.vector_store %arg6[%c0_19, %c0_20, %c0_21], %23 {strides = array<i32>} : memref<1x16x256xf32, #tpu.memory_space<vmem>>, vector<1x16x256xf32>,
    return
  }
  func.func @transform_0(%arg0: i32) -> (i32, i32, i32) {
    %c0_i32 = arith.constant 0 : i32
    %c0_i32_0 = arith.constant 0 : i32
    %c0_i32_1 = arith.constant 0 : i32
    return %arg0, %c0_i32, %c0_i32_0 : i32, i32, i32
  }
  func.func @transform_1(%arg0: i32) -> (i32, i32) {
    %c0_i32 = arith.constant 0 : i32
    %c0_i32_0 = arith.constant 0 : i32
    %c0_i32_1 = arith.constant 0 : i32
    return %c0_i32, %c0_i32_0 : i32, i32
  }
  func.func @transform_2(%arg0: i32) -> (i32, i32) {
    %c0_i32 = arith.constant 0 : i32
    %c0_i32_0 = arith.constant 0 : i32
    %c0_i32_1 = arith.constant 0 : i32
    return %c0_i32, %c0_i32_0 : i32, i32
  }
  func.func @transform_3(%arg0: i32) -> (i32, i32, i32) {
    %c0_i32 = arith.constant 0 : i32
    %c0_i32_0 = arith.constant 0 : i32
    %c0_i32_1 = arith.constant 0 : i32
    %c0_i32_2 = arith.constant 0 : i32
    return %c0_i32, %c0_i32_0, %c0_i32_1 : i32, i32, i32
  }
  func.func @transform_4(%arg0: i32) -> (i32, i32) {
    %c0_i32 = arith.constant 0 : i32
    %c0_i32_0 = arith.constant 0 : i32
    %c0_i32_1 = arith.constant 0 : i32
    return %c0_i32, %c0_i32_0 : i32, i32
  }
  func.func @transform_5(%arg0: i32) -> (i32, i32, i32) {
    %c0_i32 = arith.constant 0 : i32
    %c0_i32_0 = arith.constant 0 : i32
    %c0_i32_1 = arith.constant 0 : i32
    return %arg0, %c0_i32, %c0_i32_0 : i32, i32, i32
  }
}

module attributes {stable_mosaic.version = 11 : i64} {
  func.func @_cheb_kernel(%arg0: i32, %arg1: memref<1x16x128xf32, #tpu.memory_space<vmem>>, %arg2: memref<16x16xf32, #tpu.memory_space<vmem>>, %arg3: memref<16x16xf32, #tpu.memory_space<vmem>>, %arg4: memref<3x128x256xf32, #tpu.memory_space<vmem>>, %arg5: memref<1x256xf32, #tpu.memory_space<vmem>>, %arg6: memref<1x16x256xf32, #tpu.memory_space<vmem>>) attributes {dimension_semantics = [#tpu.dimension_semantics<parallel>], iteration_bounds = array<i64: 1>, scalar_prefetch = 0 : i64, scratch_operands = 0 : i64, tpu.core_type = #tpu.core_type<tc>, window_params = [{transform_indices = @transform_0, window_bounds = array<i64: 1, 16, 128>}, {pipeline_mode = #tpu.pipeline_mode<synchronous>, transform_indices = @transform_1, window_bounds = array<i64: 16, 16>}, {pipeline_mode = #tpu.pipeline_mode<synchronous>, transform_indices = @transform_2, window_bounds = array<i64: 16, 16>}, {pipeline_mode = #tpu.pipeline_mode<synchronous>, transform_indices = @transform_3, window_bounds = array<i64: 3, 128, 256>}, {pipeline_mode = #tpu.pipeline_mode<synchronous>, transform_indices = @transform_4, window_bounds = array<i64: 1, 256>}, {transform_indices = @transform_5, window_bounds = array<i64: 1, 16, 256>}]} {
    %c0 = arith.constant 0 : index
    %c0_0 = arith.constant 0 : index
    %c0_1 = arith.constant 0 : index
    %0 = vector.load %arg1[%c0, %c0_0, %c0_1] : memref<1x16x128xf32, #tpu.memory_space<vmem>>, vector<1x16x128xf32>
    %1 = vector.shape_cast %0 : vector<1x16x128xf32> to vector<16x128xf32>
    %c0_2 = arith.constant 0 : index
    %c0_3 = arith.constant 0 : index
    %c0_4 = arith.constant 0 : index
    %2 = vector.load %arg4[%c0_2, %c0_3, %c0_4] : memref<3x128x256xf32, #tpu.memory_space<vmem>>, vector<1x128x256xf32>
    %3 = vector.shape_cast %2 : vector<1x128x256xf32> to vector<128x256xf32>
    %cst = arith.constant dense<0.000000e+00> : vector<16x256xf32>
    %4 = tpu.matmul %1, %3, %cst {dimension_numbers = #tpu.dot_dimension_numbers<[1], [0], [0], [1], [0, 0, 1, 1], [], []>} : vector<16x128xf32>, vector<128x256xf32>, vector<16x256xf32> -> vector<16x256xf32>
    %c0_5 = arith.constant 0 : index
    %c0_6 = arith.constant 0 : index
    %5 = vector.load %arg2[%c0_5, %c0_6] : memref<16x16xf32, #tpu.memory_space<vmem>>, vector<16x16xf32>
    %cst_7 = arith.constant dense<0.000000e+00> : vector<16x128xf32>
    %6 = tpu.matmul %5, %1, %cst_7 {dimension_numbers = #tpu.dot_dimension_numbers<[1], [0], [0], [1], [0, 0, 1, 1], [], []>} : vector<16x16xf32>, vector<16x128xf32>, vector<16x128xf32> -> vector<16x128xf32>
    %c1 = arith.constant 1 : index
    %c0_8 = arith.constant 0 : index
    %c0_9 = arith.constant 0 : index
    %7 = vector.load %arg4[%c1, %c0_8, %c0_9] : memref<3x128x256xf32, #tpu.memory_space<vmem>>, vector<1x128x256xf32>
    %8 = vector.shape_cast %7 : vector<1x128x256xf32> to vector<128x256xf32>
    %cst_10 = arith.constant dense<0.000000e+00> : vector<16x256xf32>
    %9 = tpu.matmul %6, %8, %cst_10 {dimension_numbers = #tpu.dot_dimension_numbers<[1], [0], [0], [1], [0, 0, 1, 1], [], []>} : vector<16x128xf32>, vector<128x256xf32>, vector<16x256xf32> -> vector<16x256xf32>
    %10 = arith.addf %4, %9 : vector<16x256xf32>
    %c0_11 = arith.constant 0 : index
    %c0_12 = arith.constant 0 : index
    %11 = vector.load %arg3[%c0_11, %c0_12] : memref<16x16xf32, #tpu.memory_space<vmem>>, vector<16x16xf32>
    %cst_13 = arith.constant dense<0.000000e+00> : vector<16x128xf32>
    %12 = tpu.matmul %11, %6, %cst_13 {dimension_numbers = #tpu.dot_dimension_numbers<[1], [0], [0], [1], [0, 0, 1, 1], [], []>} : vector<16x16xf32>, vector<16x128xf32>, vector<16x128xf32> -> vector<16x128xf32>
    %13 = arith.subf %12, %1 : vector<16x128xf32>
    %c2 = arith.constant 2 : index
    %c0_14 = arith.constant 0 : index
    %c0_15 = arith.constant 0 : index
    %14 = vector.load %arg4[%c2, %c0_14, %c0_15] : memref<3x128x256xf32, #tpu.memory_space<vmem>>, vector<1x128x256xf32>
    %15 = vector.shape_cast %14 : vector<1x128x256xf32> to vector<128x256xf32>
    %cst_16 = arith.constant dense<0.000000e+00> : vector<16x256xf32>
    %16 = tpu.matmul %13, %15, %cst_16 {dimension_numbers = #tpu.dot_dimension_numbers<[1], [0], [0], [1], [0, 0, 1, 1], [], []>} : vector<16x128xf32>, vector<128x256xf32>, vector<16x256xf32> -> vector<16x256xf32>
    %17 = arith.addf %10, %16 : vector<16x256xf32>
    %c0_17 = arith.constant 0 : index
    %c0_18 = arith.constant 0 : index
    %18 = vector.load %arg5[%c0_17, %c0_18] : memref<1x256xf32, #tpu.memory_space<vmem>>, vector<1x256xf32>
    %19 = vector.broadcast %18 : vector<1x256xf32> to vector<16x256xf32>
    %20 = arith.addf %17, %19 : vector<16x256xf32>
    %c0_19 = arith.constant 0 : index
    %c0_20 = arith.constant 0 : index
    %c0_21 = arith.constant 0 : index
    %21 = vector.load %arg6[%c0_19, %c0_20, %c0_21] : memref<1x16x256xf32, #tpu.memory_space<vmem>>, vector<1x16x256xf32>
    %22 = vector.shape_cast %21 : vector<1x16x256xf32> to vector<16x256xf32>
    %23 = vector.shape_cast %20 : vector<16x256xf32> to vector<1x16x256xf32>
    tpu.vector_store %arg6[%c0_19, %c0_20, %c0_21], %23 {strides = array<i32>} : memref<1x16x256xf32, #tpu.memory_space<vmem>>, vector<1x16x256xf32>,
    return
  }
  func.func @transform_0(%arg0: i32) -> (i32, i32, i32) {
    %c0_i32 = arith.constant 0 : i32
    %c0_i32_0 = arith.constant 0 : i32
    %c0_i32_1 = arith.constant 0 : i32
    return %arg0, %c0_i32, %c0_i32_0 : i32, i32, i32
  }
  func.func @transform_1(%arg0: i32) -> (i32, i32) {
    %c0_i32 = arith.constant 0 : i32
    %c0_i32_0 = arith.constant 0 : i32
    %c0_i32_1 = arith.constant 0 : i32
    return %c0_i32, %c0_i32_0 : i32, i32
  }
  func.func @transform_2(%arg0: i32) -> (i32, i32) {
    %c0_i32 = arith.constant 0 : i32
    %c0_i32_0 = arith.constant 0 : i32
    %c0_i32_1 = arith.constant 0 : i32
    return %c0_i32, %c0_i32_0 : i32, i32
  }
  func.func @transform_3(%arg0: i32) -> (i32, i32, i32) {
    %c0_i32 = arith.constant 0 : i32
    %c0_i32_0 = arith.constant 0 : i32
    %c0_i32_1 = arith.constant 0 : i32
    %c0_i32_2 = arith.constant 0 : i32
    return %c0_i32, %c0_i32_0, %c0_i32_1 : i32, i32, i32
  }
  func.func @transform_4(%arg0: i32) -> (i32, i32) {
    %c0_i32 = arith.constant 0 : i32
    %c0_i32_0 = arith.constant 0 : i32
    %c0_i32_1 = arith.constant 0 : i32
    return %c0_i32, %c0_i32_0 : i32, i32
  }
  func.func @transform_5(%arg0: i32) -> (i32, i32, i32) {
    %c0_i32 = arith.constant 0 : i32
    %c0_i32_0 = arith.constant 0 : i32
    %c0_i32_1 = arith.constant 0 : i32
    return %arg0, %c0_i32, %c0_i32_0 : i32, i32, i32
  }
}

</mosaic_0001>

<llo_original>
// kernel: tpu_custom_call.1
$region0: #{tpu_custom_call.1}
  #allocation0 [shape = 'u32[]', space=smem, size = 0x4, offset = 0x4, fixed_abs, tag = 'smem constant byte address 0x4 - core index']
  #allocation1 [shape = 'u32[144,128]{1,0:T(1,128)}', space=vmem, size = 0x12000, scoped, tag = 'internal scratch']
  %s0 = inlined_call_operand.hbm [shape: f32[1,16,128], index: 0, kind: input, shape index: {}]
  %s1 = inlined_call_operand.hbm [shape: f32[16,16], index: 1, kind: input, shape index: {}]
  %s2 = inlined_call_operand.hbm [shape: f32[16,16], index: 2, kind: input, shape index: {}]
  %s3 = inlined_call_operand.hbm [shape: f32[3,128,256], index: 3, kind: input, shape index: {}]
  %s4 = inlined_call_operand.vmem [shape: f32[1,256], index: 4, kind: input, shape index: {}]
  %s5 = inlined_call_operand.hbm [shape: f32[1,16,256], index: 5, kind: output, shape index: {}]
  %s6 = sld [smem:[#allocation0]]
  $region46: #{tpu_custom_call.1} parent=0
    _
  %s8 = ssub.s32 1, %s6
  %s9 = scalar_select 0, %s8, %s6
  $region1: #{tpu_custom_call.1} parent=0
    #allocation2 [shape = 'u8[8192]{0}', space=vmem, size = 0x2000, scoped, tag = 'input window, operand 0, single buffered']
    #allocation3 [shape = 's32[1]{0}', space=sflag, size = 0x4, scoped, tag = 'scoped memory for tpu_custom_call.1']
    #allocation4 [shape = 's32[1]{0}', space=sflag, size = 0x4, scoped, tag = 'scoped memory for tpu_custom_call.1']
    #allocation5 [shape = 'u8[8192]{0}', space=vmem, size = 0x2000, scoped, tag = 'input window, operand 1, single buffered']
    #allocation6 [shape = 's32[1]{0}', space=sflag, size = 0x4, scoped, tag = 'scoped memory for tpu_custom_call.1']
    #allocation7 [shape = 'u8[8192]{0}', space=vmem, size = 0x2000, scoped, tag = 'input window, operand 2, single buffered']
    #allocation8 [shape = 'u8[393216]{0}', space=vmem, size = 0x60000, scoped, tag = 'input window, operand 3, single buffered']
    #allocation9 [shape = 's32[1]{0}', space=sflag, size = 0x4, scoped, tag = 'scoped memory for tpu_custom_call.1']
    #allocation10 [shape = 'u8[16384]{0}', space=vmem, size = 0x4000, scoped, tag = 'output window, operand 0, single buffered']
    %10 = vsyncpa [#allocation3], 0
    %11 = vsyncpa [#allocation6], 0
    %12 = vsyncpa [#allocation9], 0
    %13 = vsyncpa [#allocation4], 0
    // Predicated region
    $region2: #{tpu_custom_call.1} parent=1 // pred_check
      _
    $region3: #{tpu_custom_call.1} parent=1 // pred_check_branch
      %15 = sbr.rel (0) target = $region5
    $region4: #{tpu_custom_call.1} parent=1 // pred_region
      %s17 = ssub.s32 256, 256
      %18 = vsyncadd [#allocation3], %s17
      %s19 = sshll.u32 [#allocation2], 4
      %s20 = int_to_ptr.vmem [resolvable:$true] %s19
      %25 = dma.hbm_to_vmem [thread:$0]  %s0, 256, %s20, [#allocation3], 128, 128, 8
    $region5: #{tpu_custom_call.1} parent=1 // pred_fallthru
      _
    // Predicated region
    $region6: #{tpu_custom_call.1} parent=1 // pred_check
      _
    $region7: #{tpu_custom_call.1} parent=1 // pred_check_branch
      %27 = sbr.rel (0) target = $region9
    $region8: #{tpu_custom_call.1} parent=1 // pred_region
      %s29 = ssub.s32 256, 256
      %30 = vsyncadd [#allocation6], %s29
      %s31 = sshll.u32 [#allocation5], 4
      %s32 = int_to_ptr.vmem [resolvable:$true] %s31
      %37 = dma.hbm_to_vmem [thread:$0]  %s1, 256, %s32, [#allocation6], 128, 128, 8
    $region9: #{tpu_custom_call.1} parent=1 // pred_fallthru
      _
    // Predicated region
    $region10: #{tpu_custom_call.1} parent=1 // pred_check
      _
    $region11: #{tpu_custom_call.1} parent=1 // pred_check_branch
      %39 = sbr.rel (0) target = $region13
    $region12: #{tpu_custom_call.1} parent=1 // pred_region
      %s41 = ssub.s32 256, 256
      %42 = vsyncadd [#allocation6], %s41
      %s43 = sshll.u32 [#allocation7], 4
      %s44 = int_to_ptr.vmem [resolvable:$true] %s43
      %49 = dma.hbm_to_vmem [thread:$0]  %s2, 256, %s44, [#allocation6], 128, 128, 8
    $region13: #{tpu_custom_call.1} parent=1 // pred_fallthru
      _
    // Predicated region
    $region14: #{tpu_custom_call.1} parent=1 // pred_check
      _
    $region15: #{tpu_custom_call.1} parent=1 // pred_check_branch
      %51 = sbr.rel (0) target = $region17
    $region16: #{tpu_custom_call.1} parent=1 // pred_region
      %s53 = ssub.s32 12288, 12288
      %54 = vsyncadd [#allocation9], %s53
      %s55 = sshll.u32 [#allocation8], 4
      %s56 = int_to_ptr.vmem [resolvable:$true] %s55
      %61 = dma.hbm_to_vmem [thread:$0]  %s3, 12288, %s56, [#allocation9], 256, 256, 16
    $region17: #{tpu_custom_call.1} parent=1 // pred_fallthru
      _
    // Predicated region
    $region18: #{tpu_custom_call.1} parent=1 // pred_check
      _
    $region19: #{tpu_custom_call.1} parent=1 // pred_check_branch
      %63 = sbr.rel (0) target = $region21
    $region20: #{tpu_custom_call.1} parent=1 // pred_region
      _
    $region21: #{tpu_custom_call.1} parent=1 // pred_fallthru
      _
    // Predicated region
    $region22: #{tpu_custom_call.1} parent=1 // pred_check
      _
    $region23: #{tpu_custom_call.1} parent=1 // pred_check_branch
      %65 = sbr.rel (0) target = $region25
    $region24: #{tpu_custom_call.1} parent=1 // pred_region
      %66 = dma.done [#allocation3], 256
    $region25: #{tpu_custom_call.1} parent=1 // pred_fallthru
      _
    // Predicated region
    $region26: #{tpu_custom_call.1} parent=1 // pred_check
      _
    $region27: #{tpu_custom_call.1} parent=1 // pred_check_branch
      %68 = sbr.rel (0) target = $region29
    $region28: #{tpu_custom_call.1} parent=1 // pred_region
      %69 = dma.done [#allocation6], 256
    $region29: #{tpu_custom_call.1} parent=1 // pred_fallthru
      _
    // Predicated region
    $region30: #{tpu_custom_call.1} parent=1 // pred_check
      _
    $region31: #{tpu_custom_call.1} parent=1 // pred_check_branch
      %71 = sbr.rel (0) target = $region33
    $region32: #{tpu_custom_call.1} parent=1 // pred_region
      %72 = dma.done [#allocation6], 256
    $region33: #{tpu_custom_call.1} parent=1 // pred_fallthru
      _
    // Predicated region
    $region34: #{tpu_custom_call.1} parent=1 // pred_check
      _
    $region35: #{tpu_custom_call.1} parent=1 // pred_check_branch
      %74 = sbr.rel (0) target = $region37
    $region36: #{tpu_custom_call.1} parent=1 // pred_region
      %75 = dma.done [#allocation9], 12288
    $region37: #{tpu_custom_call.1} parent=1 // pred_fallthru
      _
    %v76 = vld [vmem:[#allocation2] sm:$0xff]
    %v77 = vld [vmem:[#allocation2 + $0x8] sm:$0xff]
    %v78 = vld [vmem:[#allocation8] sm:$0xff]
    %v79 = vld [vmem:[#allocation8 + $0x8] sm:$0xff]
    %v80 = vld [vmem:[#allocation8 + $0x10] sm:$0xff]
    %v81 = vld [vmem:[#allocation8 + $0x18] sm:$0xff]
    %v82 = vld [vmem:[#allocation8 + $0x20] sm:$0xff]
    %v83 = vld [vmem:[#allocation8 + $0x28] sm:$0xff]
    %v84 = vld [vmem:[#allocation8 + $0x30] sm:$0xff]
    %v85 = vld [vmem:[#allocation8 + $0x38] sm:$0xff]
    %v86 = vld [vmem:[#allocation8 + $0x40] sm:$0xff]
    %v87 = vld [vmem:[#allocation8 + $0x48] sm:$0xff]
    %v88 = vld [vmem:[#allocation8 + $0x50] sm:$0xff]
    %v89 = vld [vmem:[#allocation8 + $0x58] sm:$0xff]
    %v90 = vld [vmem:[#allocation8 + $0x60] sm:$0xff]
    %v91 = vld [vmem:[#allocation8 + $0x68] sm:$0xff]
    %v92 = vld [vmem:[#allocation8 + $0x70] sm:$0xff]
    %v93 = vld [vmem:[#allocation8 + $0x78] sm:$0xff]
    %v94 = vld [vmem:[#allocation8 + $0x80] sm:$0xff]
    %v95 = vld [vmem:[#allocation8 + $0x88] sm:$0xff]
    %v96 = vld [vmem:[#allocation8 + $0x90] sm:$0xff]
    %v97 = vld [vmem:[#allocation8 + $0x98] sm:$0xff]
    %v98 = vld [vmem:[#allocation8 + $0xa0] sm:$0xff]
    %v99 = vld [vmem:[#allocation8 + $0xa8] sm:$0xff]
    %v100 = vld [vmem:[#allocation8 + $0xb0] sm:$0xff]
    %v101 = vld [vmem:[#allocation8 + $0xb8] sm:$0xff]
    %v102 = vld [vmem:[#allocation8 + $0xc0] sm:$0xff]
    %v103 = vld [vmem:[#allocation8 + $0xc8] sm:$0xff]
    %v104 = vld [vmem:[#allocation8 + $0xd0] sm:$0xff]
    %v105 = vld [vmem:[#allocation8 + $0xd8] sm:$0xff]
    %v106 = vld [vmem:[#allocation8 + $0xe0] sm:$0xff]
    %v107 = vld [vmem:[#allocation8 + $0xe8] sm:$0xff]
    %v108 = vld [vmem:[#allocation8 + $0xf0] sm:$0xff]
    %v109 = vld [vmem:[#allocation8 + $0xf8] sm:$0xff]
    %v110 = vld [vmem:[#allocation5] sm:$0xff]
    %v111 = vld [vmem:[#allocation5 + $0x8] sm:$0xff]
    %vm112 = vcmask 130048
    %v114 = vsel %vm112, %v110, 0
    %v117 = vsel %vm112, %v111, 0
    %119 = vmatprep.subr.mxu0 0.0
    %120 = vmatpush1.msra.mxu0 %v76
    %121 = vmatprep.subr.mxu0 0.0
    %122 = vmatpush1.msra.mxu0 %v77
    %123 = vmatprep.subr.mxu0 0.0
    %124 = vmatpush1.msra.mxu0 0.0
    %125 = vmatprep.subr.mxu0 0.0
    %126 = vmatpush1.msra.mxu0 0.0
    %127 = vmatprep.subr.mxu0 0.0
    %128 = vmatpush1.msra.mxu0 0.0
    %129 = vmatprep.subr.mxu0 0.0
    %130 = vmatpush1.msra.mxu0 0.0
    %131 = vmatprep.subr.mxu0 0.0
    %132 = vmatpush1.msra.mxu0 0.0
    %133 = vmatprep.subr.mxu0 0.0
    %134 = vmatpush1.msra.mxu0 0.0
    %135 = vmatprep.subr.mxu0 0.0
    %136 = vmatpush1.msra.mxu0 0.0
    %137 = vmatprep.subr.mxu0 0.0
    %138 = vmatpush1.msra.mxu0 0.0
    %139 = vmatprep.subr.mxu0 0.0
    %140 = vmatpush1.msra.mxu0 0.0
    %141 = vmatprep.subr.mxu0 0.0
    %142 = vmatpush1.msra.mxu0 0.0
    %143 = vmatprep.subr.mxu0 0.0
    %144 = vmatpush1.msra.mxu0 0.0
    %145 = vmatprep.subr.mxu0 0.0
    %146 = vmatpush1.msra.mxu0 0.0
    %147 = vmatprep.subr.mxu0 0.0
    %148 = vmatpush1.msra.mxu0 0.0
    %149 = vmatprep.subr.mxu0 0.0
    %150 = vmatpush1.msra.mxu0 0.0
    %151 = vmatprep.subr.mxu0 0.0
    %152 = vmatpush1.msra.mxu0 0.0
    %153 = vmatprep.subr.mxu0 0.0
    %154 = vmatpush1.msra.mxu0 0.0
    %155 = vmatprep.subr.mxu0 0.0
    %156 = vmatpush1.msra.mxu0 0.0
    %157 = vmatprep.subr.mxu0 0.0
    %158 = vmatpush1.msra.mxu0 0.0
    %159 = vmatprep.subr.mxu0 0.0
    %160 = vmatpush1.msra.mxu0 0.0
    %161 = vmatprep.subr.mxu0 0.0
    %162 = vmatpush1.msra.mxu0 0.0
    %163 = vmatprep.subr.mxu0 0.0
    %164 = vmatpush1.msra.mxu0 0.0
    %165 = vmatprep.subr.mxu0 0.0
    %166 = vmatpush1.msra.mxu0 0.0
    %167 = vmatprep.subr.mxu0 0.0
    %168 = vmatpush1.msra.mxu0 0.0
    %169 = vmatprep.subr.mxu0 0.0
    %170 = vmatpush1.msra.mxu0 0.0
    %171 = vmatprep.subr.mxu0 0.0
    %172 = vmatpush1.msra.mxu0 0.0
    %173 = vmatprep.subr.mxu0 0.0
    %174 = vmatpush1.msra.mxu0 0.0
    %175 = vmatprep.subr.mxu0 0.0
    %176 = vmatpush1.msra.mxu0 0.0
    %177 = vmatprep.subr.mxu0 0.0
    %178 = vmatpush1.msra.mxu0 0.0
    %179 = vmatprep.subr.mxu0 0.0
    %180 = vmatpush1.msra.mxu0 0.0
    %181 = vmatprep.subr.mxu0 0.0
    %182 = vmatpush1.msra.mxu0 0.0
    %183 = vmatprep.mubr.f32.mxu0 0.0
    %184 = vmatmul.mubr.f32.gmra.mrb[0].mxu0 %v114
    %v185 = vpop.f32.mrb[0].mxu0
    %v186 = vadd.f32 0.0, %v185
    %v187 = vpop.f32.mrb[0].mxu0
    %188 = vmatprep.mubr.f32.mxu0 0.0
    %189 = vmatmul.mubr.f32.gmra.mrb[0].mxu0 %v117
    %v190 = vpop.f32.mrb[0].mxu0
    %v191 = vadd.f32 0.0, %v190
    %v192 = vpop.f32.mrb[0].mxu0
    %193 = vdwg.mxu0
    %s194 = scalar_lea.vmem [#allocation8], 256
    %v195 = vld [vmem:[%s194] sm:$0xff]
    %v196 = vld [vmem:[%s194 + $0x8] sm:$0xff]
    %v197 = vld [vmem:[%s194 + $0x10] sm:$0xff]
    %v198 = vld [vmem:[%s194 + $0x18] sm:$0xff]
    %v199 = vld [vmem:[%s194 + $0x20] sm:$0xff]
    %v200 = vld [vmem:[%s194 + $0x28] sm:$0xff]
    %v201 = vld [vmem:[%s194 + $0x30] sm:$0xff]
    %v202 = vld [vmem:[%s194 + $0x38] sm:$0xff]
    %v203 = vld [vmem:[%s194 + $0x40] sm:$0xff]
    %v204 = vld [vmem:[%s194 + $0x48] sm:$0xff]
    %v205 = vld [vmem:[%s194 + $0x50] sm:$0xff]
    %v206 = vld [vmem:[%s194 + $0x58] sm:$0xff]
    %v207 = vld [vmem:[%s194 + $0x60] sm:$0xff]
    %v208 = vld [vmem:[%s194 + $0x68] sm:$0xff]
    %v209 = vld [vmem:[%s194 + $0x70] sm:$0xff]
    %v210 = vld [vmem:[%s194 + $0x78] sm:$0xff]
    %v211 = vld [vmem:[%s194 + $0x80] sm:$0xff]
    %v212 = vld [vmem:[%s194 + $0x88] sm:$0xff]
    %v213 = vld [vmem:[%s194 + $0x90] sm:$0xff]
    %v214 = vld [vmem:[%s194 + $0x98] sm:$0xff]
    %v215 = vld [vmem:[%s194 + $0xa0] sm:$0xff]
    %v216 = vld [vmem:[%s194 + $0xa8] sm:$0xff]
    %v217 = vld [vmem:[%s194 + $0xb0] sm:$0xff]
    %v218 = vld [vmem:[%s194 + $0xb8] sm:$0xff]
    %v219 = vld [vmem:[%s194 + $0xc0] sm:$0xff]
    %v220 = vld [vmem:[%s194 + $0xc8] sm:$0xff]
    %v221 = vld [vmem:[%s194 + $0xd0] sm:$0xff]
    %v222 = vld [vmem:[%s194 + $0xd8] sm:$0xff]
    %v223 = vld [vmem:[%s194 + $0xe0] sm:$0xff]
    %v224 = vld [vmem:[%s194 + $0xe8] sm:$0xff]
    %v225 = vld [vmem:[%s194 + $0xf0] sm:$0xff]
    %v226 = vld [vmem:[%s194 + $0xf8] sm:$0xff]
    %227 = vmatprep.subr.mxu0 %v196
    %228 = vmatpush1.msra.mxu0 %v195
    %229 = vmatprep.subr.mxu0 %v198
    %230 = vmatpush1.msra.mxu0 %v197
    %231 = vmatprep.subr.mxu0 %v200
    %232 = vmatpush1.msra.mxu0 %v199
    %233 = vmatprep.subr.mxu0 %v202
    %234 = vmatpush1.msra.mxu0 %v201
    %235 = vmatprep.subr.mxu0 %v204
    %236 = vmatpush1.msra.mxu0 %v203
    %237 = vmatprep.subr.mxu0 %v206
    %238 = vmatpush1.msra.mxu0 %v205
    %239 = vmatprep.subr.mxu0 %v208
    %240 = vmatpush1.msra.mxu0 %v207
    %241 = vmatprep.subr.mxu0 %v210
    %242 = vmatpush1.msra.mxu0 %v209
    %243 = vmatprep.subr.mxu0 %v212
    %244 = vmatpush1.msra.mxu0 %v211
    %245 = vmatprep.subr.mxu0 %v214
    %246 = vmatpush1.msra.mxu0 %v213
    %247 = vmatprep.subr.mxu0 %v216
    %248 = vmatpush1.msra.mxu0 %v215
    %249 = vmatprep.subr.mxu0 %v218
    %250 = vmatpush1.msra.mxu0 %v217
    %251 = vmatprep.subr.mxu0 %v220
    %252 = vmatpush1.msra.mxu0 %v219
    %253 = vmatprep.subr.mxu0 %v222
    %254 = vmatpush1.msra.mxu0 %v221
    %255 = vmatprep.subr.mxu0 %v224
    %256 = vmatpush1.msra.mxu0 %v223
    %257 = vmatprep.subr.mxu0 %v226
    %258 = vmatpush1.msra.mxu0 %v225
    %259 = vmatprep.subr.mxu0 0.0
    %260 = vmatpush1.msra.mxu0 0.0
    %261 = vmatprep.subr.mxu0 0.0
    %262 = vmatpush1.msra.mxu0 0.0
    %263 = vmatprep.subr.mxu0 0.0
    %264 = vmatpush1.msra.mxu0 0.0
    %265 = vmatprep.subr.mxu0 0.0
    %266 = vmatpush1.msra.mxu0 0.0
    %267 = vmatprep.subr.mxu0 0.0
    %268 = vmatpush1.msra.mxu0 0.0
    %269 = vmatprep.subr.mxu0 0.0
    %270 = vmatpush1.msra.mxu0 0.0
    %271 = vmatprep.subr.mxu0 0.0
    %272 = vmatpush1.msra.mxu0 0.0
    %273 = vmatprep.subr.mxu0 0.0
    %274 = vmatpush1.msra.mxu0 0.0
    %275 = vmatprep.subr.mxu0 0.0
    %276 = vmatpush1.msra.mxu0 0.0
    %277 = vmatprep.subr.mxu0 0.0
    %278 = vmatpush1.msra.mxu0 0.0
    %279 = vmatprep.subr.mxu0 0.0
    %280 = vmatpush1.msra.mxu0 0.0
    %281 = vmatprep.subr.mxu0 0.0
    %282 = vmatpush1.msra.mxu0 0.0
    %283 = vmatprep.subr.mxu0 0.0
    %284 = vmatpush1.msra.mxu0 0.0
    %285 = vmatprep.subr.mxu0 0.0
    %286 = vmatpush1.msra.mxu0 0.0
    %287 = vmatprep.subr.mxu0 0.0
    %288 = vmatpush1.msra.mxu0 0.0
    %289 = vmatprep.subr.mxu0 0.0
    %290 = vmatpush1.msra.mxu0 0.0
    %291 = vmatprep.mubr.f32.mxu0 0.0
    %292 = vmatmul.mubr.f32.gmra.mrb[0].mxu0 %v186
    %v293 = vpop.f32.mrb[0].mxu0
    %v294 = vadd.f32 0.0, %v293
    %v295 = vpop.f32.mrb[0].mxu0
    %v296 = vadd.f32 0.0, %v295
    %297 = vmatprep.mubr.f32.mxu0 0.0
    %298 = vmatmul.mubr.f32.gmra.mrb[0].mxu0 %v191
    %v299 = vpop.f32.mrb[0].mxu0
    %v300 = vadd.f32 0.0, %v299
    %v301 = vpop.f32.mrb[0].mxu0
    %v302 = vadd.f32 0.0, %v301
    %303 = vdwg.mxu0
    %304 = vmatprep.subr.mxu0 %v79
    %305 = vmatpush1.msra.mxu0 %v78
    %306 = vmatprep.subr.mxu0 %v81
    %307 = vmatpush1.msra.mxu0 %v80
    %308 = vmatprep.subr.mxu0 %v83
    %309 = vmatpush1.msra.mxu0 %v82
    %310 = vmatprep.subr.mxu0 %v85
    %311 = vmatpush1.msra.mxu0 %v84
    %312 = vmatprep.subr.mxu0 %v87
    %313 = vmatpush1.msra.mxu0 %v86
    %314 = vmatprep.subr.mxu0 %v89
    %315 = vmatpush1.msra.mxu0 %v88
    %316 = vmatprep.subr.mxu0 %v91
    %317 = vmatpush1.msra.mxu0 %v90
    %318 = vmatprep.subr.mxu0 %v93
    %319 = vmatpush1.msra.mxu0 %v92
    %320 = vmatprep.subr.mxu0 %v95
    %321 = vmatpush1.msra.mxu0 %v94
    %322 = vmatprep.subr.mxu0 %v97
    %323 = vmatpush1.msra.mxu0 %v96
    %324 = vmatprep.subr.mxu0 %v99
    %325 = vmatpush1.msra.mxu0 %v98
    %326 = vmatprep.subr.mxu0 %v101
    %327 = vmatpush1.msra.mxu0 %v100
    %328 = vmatprep.subr.mxu0 %v103
    %329 = vmatpush1.msra.mxu0 %v102
    %330 = vmatprep.subr.mxu0 %v105
    %331 = vmatpush1.msra.mxu0 %v104
    %332 = vmatprep.subr.mxu0 %v107
    %333 = vmatpush1.msra.mxu0 %v106
    %334 = vmatprep.subr.mxu0 %v109
    %335 = vmatpush1.msra.mxu0 %v108
    %336 = vmatprep.subr.mxu0 0.0
    %337 = vmatpush1.msra.mxu0 0.0
    %338 = vmatprep.subr.mxu0 0.0
    %339 = vmatpush1.msra.mxu0 0.0
    %340 = vmatprep.subr.mxu0 0.0
    %341 = vmatpush1.msra.mxu0 0.0
    %342 = vmatprep.subr.mxu0 0.0
    %343 = vmatpush1.msra.mxu0 0.0
    %344 = vmatprep.subr.mxu0 0.0
    %345 = vmatpush1.msra.mxu0 0.0
    %346 = vmatprep.subr.mxu0 0.0
    %347 = vmatpush1.msra.mxu0 0.0
    %348 = vmatprep.subr.mxu0 0.0
    %349 = vmatpush1.msra.mxu0 0.0
    %350 = vmatprep.subr.mxu0 0.0
    %351 = vmatpush1.msra.mxu0 0.0
    %352 = vmatprep.subr.mxu0 0.0
    %353 = vmatpush1.msra.mxu0 0.0
    %354 = vmatprep.subr.mxu0 0.0
    %355 = vmatpush1.msra.mxu0 0.0
    %356 = vmatprep.subr.mxu0 0.0
    %357 = vmatpush1.msra.mxu0 0.0
    %358 = vmatprep.subr.mxu0 0.0
    %359 = vmatpush1.msra.mxu0 0.0
    %360 = vmatprep.subr.mxu0 0.0
    %361 = vmatpush1.msra.mxu0 0.0
    %362 = vmatprep.subr.mxu0 0.0
    %363 = vmatpush1.msra.mxu0 0.0
    %364 = vmatprep.subr.mxu0 0.0
    %365 = vmatpush1.msra.mxu0 0.0
    %366 = vmatprep.subr.mxu0 0.0
    %367 = vmatpush1.msra.mxu0 0.0
    %368 = vmatprep.mubr.f32.mxu0 0.0
    %369 = vmatmul.mubr.f32.gmra.mrb[0].mxu0 %v76
    %v370 = vpop.f32.mrb[0].mxu0
    %v371 = vadd.f32 %v294, %v370
    %v372 = vpop.f32.mrb[0].mxu0
    %v373 = vadd.f32 %v296, %v372
    %374 = vmatprep.mubr.f32.mxu0 0.0
    %375 = vmatmul.mubr.f32.gmra.mrb[0].mxu0 %v77
    %v376 = vpop.f32.mrb[0].mxu0
    %v377 = vadd.f32 %v300, %v376
    %v378 = vpop.f32.mrb[0].mxu0
    %v379 = vadd.f32 %v302, %v378
    %380 = vdwg.mxu0
    %v381 = vld [vmem:[#allocation7] sm:$0xff]
    %v382 = vld [vmem:[#allocation7 + $0x8] sm:$0xff]
    %v384 = vsel %vm112, %v381, 0
    %v387 = vsel %vm112, %v382, 0
    %389 = vmatprep.subr.mxu0 0.0
    %390 = vmatpush1.msra.mxu0 %v186
    %391 = vmatprep.subr.mxu0 0.0
    %392 = vmatpush1.msra.mxu0 %v191
    %393 = vmatprep.subr.mxu0 0.0
    %394 = vmatpush1.msra.mxu0 0.0
    %395 = vmatprep.subr.mxu0 0.0
    %396 = vmatpush1.msra.mxu0 0.0
    %397 = vmatprep.subr.mxu0 0.0
    %398 = vmatpush1.msra.mxu0 0.0
    %399 = vmatprep.subr.mxu0 0.0
    %400 = vmatpush1.msra.mxu0 0.0
    %401 = vmatprep.subr.mxu0 0.0
    %402 = vmatpush1.msra.mxu0 0.0
    %403 = vmatprep.subr.mxu0 0.0
    %404 = vmatpush1.msra.mxu0 0.0
    %405 = vmatprep.subr.mxu0 0.0
    %406 = vmatpush1.msra.mxu0 0.0
    %407 = vmatprep.subr.mxu0 0.0
    %408 = vmatpush1.msra.mxu0 0.0
    %409 = vmatprep.subr.mxu0 0.0
    %410 = vmatpush1.msra.mxu0 0.0
    %411 = vmatprep.subr.mxu0 0.0
    %412 = vmatpush1.msra.mxu0 0.0
    %413 = vmatprep.subr.mxu0 0.0
    %414 = vmatpush1.msra.mxu0 0.0
    %415 = vmatprep.subr.mxu0 0.0
    %416 = vmatpush1.msra.mxu0 0.0
    %417 = vmatprep.subr.mxu0 0.0
    %418 = vmatpush1.msra.mxu0 0.0
    %419 = vmatprep.subr.mxu0 0.0
    %420 = vmatpush1.msra.mxu0 0.0
    %421 = vmatprep.subr.mxu0 0.0
    %422 = vmatpush1.msra.mxu0 0.0
    %423 = vmatprep.subr.mxu0 0.0
    %424 = vmatpush1.msra.mxu0 0.0
    %425 = vmatprep.subr.mxu0 0.0
    %426 = vmatpush1.msra.mxu0 0.0
    %427 = vmatprep.subr.mxu0 0.0
    %428 = vmatpush1.msra.mxu0 0.0
    %429 = vmatprep.subr.mxu0 0.0
    %430 = vmatpush1.msra.mxu0 0.0
    %431 = vmatprep.subr.mxu0 0.0
    %432 = vmatpush1.msra.mxu0 0.0
    %433 = vmatprep.subr.mxu0 0.0
    %434 = vmatpush1.msra.mxu0 0.0
    %435 = vmatprep.subr.mxu0 0.0
    %436 = vmatpush1.msra.mxu0 0.0
    %437 = vmatprep.subr.mxu0 0.0
    %438 = vmatpush1.msra.mxu0 0.0
    %439 = vmatprep.subr.mxu0 0.0
    %440 = vmatpush1.msra.mxu0 0.0
    %441 = vmatprep.subr.mxu0 0.0
    %442 = vmatpush1.msra.mxu0 0.0
    %443 = vmatprep.subr.mxu0 0.0
    %444 = vmatpush1.msra.mxu0 0.0
    %445 = vmatprep.subr.mxu0 0.0
    %446 = vmatpush1.msra.mxu0 0.0
    %447 = vmatprep.subr.mxu0 0.0
    %448 = vmatpush1.msra.mxu0 0.0
    %449 = vmatprep.subr.mxu0 0.0
    %450 = vmatpush1.msra.mxu0 0.0
    %451 = vmatprep.subr.mxu0 0.0
    %452 = vmatpush1.msra.mxu0 0.0
    %453 = vmatprep.mubr.f32.mxu0 0.0
    %454 = vmatmul.mubr.f32.gmra.mrb[0].mxu0 %v384
    %v455 = vpop.f32.mrb[0].mxu0
    %v456 = vadd.f32 0.0, %v455
    %v457 = vpop.f32.mrb[0].mxu0
    %458 = vmatprep.mubr.f32.mxu0 0.0
    %459 = vmatmul.mubr.f32.gmra.mrb[0].mxu0 %v387
    %v460 = vpop.f32.mrb[0].mxu0
    %v461 = vadd.f32 0.0, %v460
    %v462 = vpop.f32.mrb[0].mxu0
    %463 = vdwg.mxu0
    %v464 = vsub.f32 %v456, %v76
    %v465 = vsub.f32 %v461, %v77
    %s466 = scalar_lea.vmem [#allocation8], 512
    %v467 = vld [vmem:[%s466] sm:$0xff]
    %v468 = vld [vmem:[%s466 + $0x8] sm:$0xff]
    %v469 = vld [vmem:[%s466 + $0x10] sm:$0xff]
    %v470 = vld [vmem:[%s466 + $0x18] sm:$0xff]
    %v471 = vld [vmem:[%s466 + $0x20] sm:$0xff]
    %v472 = vld [vmem:[%s466 + $0x28] sm:$0xff]
    %v473 = vld [vmem:[%s466 + $0x30] sm:$0xff]
    %v474 = vld [vmem:[%s466 + $0x38] sm:$0xff]
    %v475 = vld [vmem:[%s466 + $0x40] sm:$0xff]
    %v476 = vld [vmem:[%s466 + $0x48] sm:$0xff]
    %v477 = vld [vmem:[%s466 + $0x50] sm:$0xff]
    %v478 = vld [vmem:[%s466 + $0x58] sm:$0xff]
    %v479 = vld [vmem:[%s466 + $0x60] sm:$0xff]
    %v480 = vld [vmem:[%s466 + $0x68] sm:$0xff]
    %v481 = vld [vmem:[%s466 + $0x70] sm:$0xff]
    %v482 = vld [vmem:[%s466 + $0x78] sm:$0xff]
    %v483 = vld [vmem:[%s466 + $0x80] sm:$0xff]
    %v484 = vld [vmem:[%s466 + $0x88] sm:$0xff]
    %v485 = vld [vmem:[%s466 + $0x90] sm:$0xff]
    %v486 = vld [vmem:[%s466 + $0x98] sm:$0xff]
    %v487 = vld [vmem:[%s466 + $0xa0] sm:$0xff]
    %v488 = vld [vmem:[%s466 + $0xa8] sm:$0xff]
    %v489 = vld [vmem:[%s466 + $0xb0] sm:$0xff]
    %v490 = vld [vmem:[%s466 + $0xb8] sm:$0xff]
    %v491 = vld [vmem:[%s466 + $0xc0] sm:$0xff]
    %v492 = vld [vmem:[%s466 + $0xc8] sm:$0xff]
    %v493 = vld [vmem:[%s466 + $0xd0] sm:$0xff]
    %v494 = vld [vmem:[%s466 + $0xd8] sm:$0xff]
    %v495 = vld [vmem:[%s466 + $0xe0] sm:$0xff]
    %v496 = vld [vmem:[%s466 + $0xe8] sm:$0xff]
    %v497 = vld [vmem:[%s466 + $0xf0] sm:$0xff]
    %v498 = vld [vmem:[%s466 + $0xf8] sm:$0xff]
    %499 = vmatprep.subr.mxu0 %v468
    %500 = vmatpush1.msra.mxu0 %v467
    %501 = vmatprep.subr.mxu0 %v470
    %502 = vmatpush1.msra.mxu0 %v469
    %503 = vmatprep.subr.mxu0 %v472
    %504 = vmatpush1.msra.mxu0 %v471
    %505 = vmatprep.subr.mxu0 %v474
    %506 = vmatpush1.msra.mxu0 %v473
    %507 = vmatprep.subr.mxu0 %v476
    %508 = vmatpush1.msra.mxu0 %v475
    %509 = vmatprep.subr.mxu0 %v478
    %510 = vmatpush1.msra.mxu0 %v477
    %511 = vmatprep.subr.mxu0 %v480
    %512 = vmatpush1.msra.mxu0 %v479
    %513 = vmatprep.subr.mxu0 %v482
    %514 = vmatpush1.msra.mxu0 %v481
    %515 = vmatprep.subr.mxu0 %v484
    %516 = vmatpush1.msra.mxu0 %v483
    %517 = vmatprep.subr.mxu0 %v486
    %518 = vmatpush1.msra.mxu0 %v485
    %519 = vmatprep.subr.mxu0 %v488
    %520 = vmatpush1.msra.mxu0 %v487
    %521 = vmatprep.subr.mxu0 %v490
    %522 = vmatpush1.msra.mxu0 %v489
    %523 = vmatprep.subr.mxu0 %v492
    %524 = vmatpush1.msra.mxu0 %v491
    %525 = vmatprep.subr.mxu0 %v494
    %526 = vmatpush1.msra.mxu0 %v493
    %527 = vmatprep.subr.mxu0 %v496
    %528 = vmatpush1.msra.mxu0 %v495
    %529 = vmatprep.subr.mxu0 %v498
    %530 = vmatpush1.msra.mxu0 %v497
    %531 = vmatprep.subr.mxu0 0.0
    %532 = vmatpush1.msra.mxu0 0.0
    %533 = vmatprep.subr.mxu0 0.0
    %534 = vmatpush1.msra.mxu0 0.0
    %535 = vmatprep.subr.mxu0 0.0
    %536 = vmatpush1.msra.mxu0 0.0
    %537 = vmatprep.subr.mxu0 0.0
    %538 = vmatpush1.msra.mxu0 0.0
    %539 = vmatprep.subr.mxu0 0.0
    %540 = vmatpush1.msra.mxu0 0.0
    %541 = vmatprep.subr.mxu0 0.0
    %542 = vmatpush1.msra.mxu0 0.0
    %543 = vmatprep.subr.mxu0 0.0
    %544 = vmatpush1.msra.mxu0 0.0
    %545 = vmatprep.subr.mxu0 0.0
    %546 = vmatpush1.msra.mxu0 0.0
    %547 = vmatprep.subr.mxu0 0.0
    %548 = vmatpush1.msra.mxu0 0.0
    %549 = vmatprep.subr.mxu0 0.0
    %550 = vmatpush1.msra.mxu0 0.0
    %551 = vmatprep.subr.mxu0 0.0
    %552 = vmatpush1.msra.mxu0 0.0
    %553 = vmatprep.subr.mxu0 0.0
    %554 = vmatpush1.msra.mxu0 0.0
    %555 = vmatprep.subr.mxu0 0.0
    %556 = vmatpush1.msra.mxu0 0.0
    %557 = vmatprep.subr.mxu0 0.0
    %558 = vmatpush1.msra.mxu0 0.0
    %559 = vmatprep.subr.mxu0 0.0
    %560 = vmatpush1.msra.mxu0 0.0
    %561 = vmatprep.subr.mxu0 0.0
    %562 = vmatpush1.msra.mxu0 0.0
    %563 = vmatprep.mubr.f32.mxu0 0.0
    %564 = vmatmul.mubr.f32.gmra.mrb[0].mxu0 %v464
    %v565 = vpop.f32.mrb[0].mxu0
    %v566 = vadd.f32 0.0, %v565
    %v567 = vpop.f32.mrb[0].mxu0
    %v568 = vadd.f32 0.0, %v567
    %569 = vmatprep.mubr.f32.mxu0 0.0
    %570 = vmatmul.mubr.f32.gmra.mrb[0].mxu0 %v465
    %v571 = vpop.f32.mrb[0].mxu0
    %v572 = vadd.f32 0.0, %v571
    %v573 = vpop.f32.mrb[0].mxu0
    %v574 = vadd.f32 0.0, %v573
    %575 = vdwg.mxu0
    %v576 = vadd.f32 %v371, %v566
    %v577 = vadd.f32 %v373, %v568
    %v578 = vadd.f32 %v377, %v572
    %v579 = vadd.f32 %v379, %v574
    %v580 = vld [vmem:[%s4] sm:$0x3]
    %v582 = vlaneseq
    %v583 = vshrl.u32 %v582, 7
    %v584 = vsub.s32 0, %v583
    %v585 = vrot.slane %v580, %v584
    %v586 = vlaneseq
    %v587 = vshrl.u32 %v586, 7
    %v588 = vsub.s32 1, %v587
    %v589 = vrot.slane %v580, %v588
    %v592 = vadd.f32 %v576, %v585
    %v593 = vadd.f32 %v577, %v589
    %v594 = vadd.f32 %v578, %v585
    %v595 = vadd.f32 %v579, %v589
    %596 = vst [vmem:[#allocation10] sm:$0xff] %v592
    %597 = vst [vmem:[#allocation10 + $0x8] sm:$0xff] %v593
    %598 = vst [vmem:[#allocation10 + $0x10] sm:$0xff] %v594
    %599 = vst [vmem:[#allocation10 + $0x18] sm:$0xff] %v595
    // Predicated region
    $region38: #{tpu_custom_call.1} parent=1 // pred_check
      _
    $region39: #{tpu_custom_call.1} parent=1 // pred_check_branch
      %601 = sbr.rel (0) target = $region41
    $region40: #{tpu_custom_call.1} parent=1 // pred_region
      %s603 = ssub.s32 512, 512
      %604 = vsyncadd [#allocation4], %s603
      %s605 = sshll.u32 [#allocation10], 4
      %s606 = int_to_ptr.vmem [resolvable:$true] %s605
      %611 = dma.vmem_to_hbm [thread:$0]  %s606, 512, %s5, [#allocation4], 256, 256, 16
    $region41: #{tpu_custom_call.1} parent=1 // pred_fallthru
      _
    // Predicated region
    $region42: #{tpu_custom_call.1} parent=1 // pred_check
      _
    $region43: #{tpu_custom_call.1} parent=1 // pred_check_branch
      %613 = sbr.rel (0) target = $region45
    $region44: #{tpu_custom_call.1} parent=1 // pred_region
      %614 = dma.done [#allocation4], 512
    $region45: #{tpu_custom_call.1} parent=1 // pred_fallthru
      _
    %615 = vsyncpa [#allocation3], 1
    %616 = vsyncpa [#allocation6], 1
    %617 = vsyncpa [#allocation9], 1
    %618 = vsyncpa [#allocation4], 1

// kernel: tpu_custom_call.1
$region0: #{tpu_custom_call.1}
  #allocation0 [shape = 'u32[]', space=smem, size = 0x4, offset = 0x4, fixed_abs, tag = 'smem constant byte address 0x4 - core index']
  #allocation1 [shape = 'u32[144,128]{1,0:T(1,128)}', space=vmem, size = 0x12000, scoped, tag = 'internal scratch']
  %s0 = inlined_call_operand.hbm [shape: f32[1,16,128], index: 0, kind: input, shape index: {}]
  %s1 = inlined_call_operand.hbm [shape: f32[16,16], index: 1, kind: input, shape index: {}]
  %s2 = inlined_call_operand.hbm [shape: f32[16,16], index: 2, kind: input, shape index: {}]
  %s3 = inlined_call_operand.hbm [shape: f32[3,128,256], index: 3, kind: input, shape index: {}]
  %s4 = inlined_call_operand.vmem [shape: f32[1,256], index: 4, kind: input, shape index: {}]
  %s5 = inlined_call_operand.hbm [shape: f32[1,16,256], index: 5, kind: output, shape index: {}]
  %s6 = sld [smem:[#allocation0]]
  $region46: #{tpu_custom_call.1} parent=0
    _
  %s8 = ssub.s32 1, %s6
  %s9 = scalar_select 0, %s8, %s6
  $region1: #{tpu_custom_call.1} parent=0
    #allocation2 [shape = 'u8[8192]{0}', space=vmem, size = 0x2000, scoped, tag = 'input window, operand 0, single buffered']
    #allocation3 [shape = 's32[1]{0}', space=sflag, size = 0x4, scoped, tag = 'scoped memory for tpu_custom_call.1']
    #allocation4 [shape = 's32[1]{0}', space=sflag, size = 0x4, scoped, tag = 'scoped memory for tpu_custom_call.1']
    #allocation5 [shape = 'u8[8192]{0}', space=vmem, size = 0x2000, scoped, tag = 'input window, operand 1, single buffered']
    #allocation6 [shape = 's32[1]{0}', space=sflag, size = 0x4, scoped, tag = 'scoped memory for tpu_custom_call.1']
    #allocation7 [shape = 'u8[8192]{0}', space=vmem, size = 0x2000, scoped, tag = 'input window, operand 2, single buffered']
    #allocation8 [shape = 'u8[393216]{0}', space=vmem, size = 0x60000, scoped, tag = 'input window, operand 3, single buffered']
    #allocation9 [shape = 's32[1]{0}', space=sflag, size = 0x4, scoped, tag = 'scoped memory for tpu_custom_call.1']
    #allocation10 [shape = 'u8[16384]{0}', space=vmem, size = 0x4000, scoped, tag = 'output window, operand 0, single buffered']
    %10 = vsyncpa [#allocation3], 0
    %11 = vsyncpa [#allocation6], 0
    %12 = vsyncpa [#allocation9], 0
    %13 = vsyncpa [#allocation4], 0
    // Predicated region
    $region2: #{tpu_custom_call.1} parent=1 // pred_check
      _
    $region3: #{tpu_custom_call.1} parent=1 // pred_check_branch
      %15 = sbr.rel (0) target = $region5
    $region4: #{tpu_custom_call.1} parent=1 // pred_region
      %s17 = ssub.s32 256, 256
      %18 = vsyncadd [#allocation3], %s17
      %s19 = sshll.u32 [#allocation2], 4
      %s20 = int_to_ptr.vmem [resolvable:$true] %s19
      %25 = dma.hbm_to_vmem [thread:$0]  %s0, 256, %s20, [#allocation3], 128, 128, 8
    $region5: #{tpu_custom_call.1} parent=1 // pred_fallthru
      _
    // Predicated region
    $region6: #{tpu_custom_call.1} parent=1 // pred_check
      _
    $region7: #{tpu_custom_call.1} parent=1 // pred_check_branch
      %27 = sbr.rel (0) target = $region9
    $region8: #{tpu_custom_call.1} parent=1 // pred_region
      %s29 = ssub.s32 256, 256
      %30 = vsyncadd [#allocation6], %s29
      %s31 = sshll.u32 [#allocation5], 4
      %s32 = int_to_ptr.vmem [resolvable:$true] %s31
      %37 = dma.hbm_to_vmem [thread:$0]  %s1, 256, %s32, [#allocation6], 128, 128, 8
    $region9: #{tpu_custom_call.1} parent=1 // pred_fallthru
      _
    // Predicated region
    $region10: #{tpu_custom_call.1} parent=1 // pred_check
      _
    $region11: #{tpu_custom_call.1} parent=1 // pred_check_branch
      %39 = sbr.rel (0) target = $region13
    $region12: #{tpu_custom_call.1} parent=1 // pred_region
      %s41 = ssub.s32 256, 256
      %42 = vsyncadd [#allocation6], %s41
      %s43 = sshll.u32 [#allocation7], 4
      %s44 = int_to_ptr.vmem [resolvable:$true] %s43
      %49 = dma.hbm_to_vmem [thread:$0]  %s2, 256, %s44, [#allocation6], 128, 128, 8
    $region13: #{tpu_custom_call.1} parent=1 // pred_fallthru
      _
    // Predicated region
    $region14: #{tpu_custom_call.1} parent=1 // pred_check
      _
    $region15: #{tpu_custom_call.1} parent=1 // pred_check_branch
      %51 = sbr.rel (0) target = $region17
    $region16: #{tpu_custom_call.1} parent=1 // pred_region
      %s53 = ssub.s32 12288, 12288
      %54 = vsyncadd [#allocation9], %s53
      %s55 = sshll.u32 [#allocation8], 4
      %s56 = int_to_ptr.vmem [resolvable:$true] %s55
      %61 = dma.hbm_to_vmem [thread:$0]  %s3, 12288, %s56, [#allocation9], 256, 256, 16
    $region17: #{tpu_custom_call.1} parent=1 // pred_fallthru
      _
    // Predicated region
    $region18: #{tpu_custom_call.1} parent=1 // pred_check
      _
    $region19: #{tpu_custom_call.1} parent=1 // pred_check_branch
      %63 = sbr.rel (0) target = $region21
    $region20: #{tpu_custom_call.1} parent=1 // pred_region
      _
    $region21: #{tpu_custom_call.1} parent=1 // pred_fallthru
      _
    // Predicated region
    $region22: #{tpu_custom_call.1} parent=1 // pred_check
      _
    $region23: #{tpu_custom_call.1} parent=1 // pred_check_branch
      %65 = sbr.rel (0) target = $region25
    $region24: #{tpu_custom_call.1} parent=1 // pred_region
      %66 = dma.done [#allocation3], 256
    $region25: #{tpu_custom_call.1} parent=1 // pred_fallthru
      _
    // Predicated region
    $region26: #{tpu_custom_call.1} parent=1 // pred_check
      _
    $region27: #{tpu_custom_call.1} parent=1 // pred_check_branch
      %68 = sbr.rel (0) target = $region29
    $region28: #{tpu_custom_call.1} parent=1 // pred_region
      %69 = dma.done [#allocation6], 256
    $region29: #{tpu_custom_call.1} parent=1 // pred_fallthru
      _
    // Predicated region
    $region30: #{tpu_custom_call.1} parent=1 // pred_check
      _
    $region31: #{tpu_custom_call.1} parent=1 // pred_check_branch
      %71 = sbr.rel (0) target = $region33
    $region32: #{tpu_custom_call.1} parent=1 // pred_region
      %72 = dma.done [#allocation6], 256
    $region33: #{tpu_custom_call.1} parent=1 // pred_fallthru
      _
    // Predicated region
    $region34: #{tpu_custom_call.1} parent=1 // pred_check
      _
    $region35: #{tpu_custom_call.1} parent=1 // pred_check_branch
      %74 = sbr.rel (0) target = $region37
    $region36: #{tpu_custom_call.1} parent=1 // pred_region
      %75 = dma.done [#allocation9], 12288
    $region37: #{tpu_custom_call.1} parent=1 // pred_fallthru
      _
    %v76 = vld [vmem:[#allocation2] sm:$0xff]
    %v77 = vld [vmem:[#allocation2 + $0x8] sm:$0xff]
    %v78 = vld [vmem:[#allocation8] sm:$0xff]
    %v79 = vld [vmem:[#allocation8 + $0x8] sm:$0xff]
    %v80 = vld [vmem:[#allocation8 + $0x10] sm:$0xff]
    %v81 = vld [vmem:[#allocation8 + $0x18] sm:$0xff]
    %v82 = vld [vmem:[#allocation8 + $0x20] sm:$0xff]
    %v83 = vld [vmem:[#allocation8 + $0x28] sm:$0xff]
    %v84 = vld [vmem:[#allocation8 + $0x30] sm:$0xff]
    %v85 = vld [vmem:[#allocation8 + $0x38] sm:$0xff]
    %v86 = vld [vmem:[#allocation8 + $0x40] sm:$0xff]
    %v87 = vld [vmem:[#allocation8 + $0x48] sm:$0xff]
    %v88 = vld [vmem:[#allocation8 + $0x50] sm:$0xff]
    %v89 = vld [vmem:[#allocation8 + $0x58] sm:$0xff]
    %v90 = vld [vmem:[#allocation8 + $0x60] sm:$0xff]
    %v91 = vld [vmem:[#allocation8 + $0x68] sm:$0xff]
    %v92 = vld [vmem:[#allocation8 + $0x70] sm:$0xff]
    %v93 = vld [vmem:[#allocation8 + $0x78] sm:$0xff]
    %v94 = vld [vmem:[#allocation8 + $0x80] sm:$0xff]
    %v95 = vld [vmem:[#allocation8 + $0x88] sm:$0xff]
    %v96 = vld [vmem:[#allocation8 + $0x90] sm:$0xff]
    %v97 = vld [vmem:[#allocation8 + $0x98] sm:$0xff]
    %v98 = vld [vmem:[#allocation8 + $0xa0] sm:$0xff]
    %v99 = vld [vmem:[#allocation8 + $0xa8] sm:$0xff]
    %v100 = vld [vmem:[#allocation8 + $0xb0] sm:$0xff]
    %v101 = vld [vmem:[#allocation8 + $0xb8] sm:$0xff]
    %v102 = vld [vmem:[#allocation8 + $0xc0] sm:$0xff]
    %v103 = vld [vmem:[#allocation8 + $0xc8] sm:$0xff]
    %v104 = vld [vmem:[#allocation8 + $0xd0] sm:$0xff]
    %v105 = vld [vmem:[#allocation8 + $0xd8] sm:$0xff]
    %v106 = vld [vmem:[#allocation8 + $0xe0] sm:$0xff]
    %v107 = vld [vmem:[#allocation8 + $0xe8] sm:$0xff]
    %v108 = vld [vmem:[#allocation8 + $0xf0] sm:$0xff]
    %v109 = vld [vmem:[#allocation8 + $0xf8] sm:$0xff]
    %v110 = vld [vmem:[#allocation5] sm:$0xff]
    %v111 = vld [vmem:[#allocation5 + $0x8] sm:$0xff]
    %vm112 = vcmask 130048
    %v114 = vsel %vm112, %v110, 0
    %v117 = vsel %vm112, %v111, 0
    %119 = vmatprep.subr.mxu0 0.0
    %120 = vmatpush1.msra.mxu0 %v76
    %121 = vmatprep.subr.mxu0 0.0
    %122 = vmatpush1.msra.mxu0 %v77
    %123 = vmatprep.subr.mxu0 0.0
    %124 = vmatpush1.msra.mxu0 0.0
    %125 = vmatprep.subr.mxu0 0.0
    %126 = vmatpush1.msra.mxu0 0.0
    %127 = vmatprep.subr.mxu0 0.0
    %128 = vmatpush1.msra.mxu0 0.0
    %129 = vmatprep.subr.mxu0 0.0
    %130 = vmatpush1.msra.mxu0 0.0
    %131 = vmatprep.subr.mxu0 0.0
    %132 = vmatpush1.msra.mxu0 0.0
    %133 = vmatprep.subr.mxu0 0.0
    %134 = vmatpush1.msra.mxu0 0.0
    %135 = vmatprep.subr.mxu0 0.0
    %136 = vmatpush1.msra.mxu0 0.0
    %137 = vmatprep.subr.mxu0 0.0
    %138 = vmatpush1.msra.mxu0 0.0
    %139 = vmatprep.subr.mxu0 0.0
    %140 = vmatpush1.msra.mxu0 0.0
    %141 = vmatprep.subr.mxu0 0.0
    %142 = vmatpush1.msra.mxu0 0.0
    %143 = vmatprep.subr.mxu0 0.0
    %144 = vmatpush1.msra.mxu0 0.0
    %145 = vmatprep.subr.mxu0 0.0
    %146 = vmatpush1.msra.mxu0 0.0
    %147 = vmatprep.subr.mxu0 0.0
    %148 = vmatpush1.msra.mxu0 0.0
    %149 = vmatprep.subr.mxu0 0.0
    %150 = vmatpush1.msra.mxu0 0.0
    %151 = vmatprep.subr.mxu0 0.0
    %152 = vmatpush1.msra.mxu0 0.0
    %153 = vmatprep.subr.mxu0 0.0
    %154 = vmatpush1.msra.mxu0 0.0
    %155 = vmatprep.subr.mxu0 0.0
    %156 = vmatpush1.msra.mxu0 0.0
    %157 = vmatprep.subr.mxu0 0.0
    %158 = vmatpush1.msra.mxu0 0.0
    %159 = vmatprep.subr.mxu0 0.0
    %160 = vmatpush1.msra.mxu0 0.0
    %161 = vmatprep.subr.mxu0 0.0
    %162 = vmatpush1.msra.mxu0 0.0
    %163 = vmatprep.subr.mxu0 0.0
    %164 = vmatpush1.msra.mxu0 0.0
    %165 = vmatprep.subr.mxu0 0.0
    %166 = vmatpush1.msra.mxu0 0.0
    %167 = vmatprep.subr.mxu0 0.0
    %168 = vmatpush1.msra.mxu0 0.0
    %169 = vmatprep.subr.mxu0 0.0
    %170 = vmatpush1.msra.mxu0 0.0
    %171 = vmatprep.subr.mxu0 0.0
    %172 = vmatpush1.msra.mxu0 0.0
    %173 = vmatprep.subr.mxu0 0.0
    %174 = vmatpush1.msra.mxu0 0.0
    %175 = vmatprep.subr.mxu0 0.0
    %176 = vmatpush1.msra.mxu0 0.0
    %177 = vmatprep.subr.mxu0 0.0
    %178 = vmatpush1.msra.mxu0 0.0
    %179 = vmatprep.subr.mxu0 0.0
    %180 = vmatpush1.msra.mxu0 0.0
    %181 = vmatprep.subr.mxu0 0.0
    %182 = vmatpush1.msra.mxu0 0.0
    %183 = vmatprep.mubr.f32.mxu0 0.0
    %184 = vmatmul.mubr.f32.gmra.mrb[0].mxu0 %v114
    %v185 = vpop.f32.mrb[0].mxu0
    %v186 = vadd.f32 0.0, %v185
    %v187 = vpop.f32.mrb[0].mxu0
    %188 = vmatprep.mubr.f32.mxu0 0.0
    %189 = vmatmul.mubr.f32.gmra.mrb[0].mxu0 %v117
    %v190 = vpop.f32.mrb[0].mxu0
    %v191 = vadd.f32 0.0, %v190
    %v192 = vpop.f32.mrb[0].mxu0
    %193 = vdwg.mxu0
    %s194 = scalar_lea.vmem [#allocation8], 256
    %v195 = vld [vmem:[%s194] sm:$0xff]
    %v196 = vld [vmem:[%s194 + $0x8] sm:$0xff]
    %v197 = vld [vmem:[%s194 + $0x10] sm:$0xff]
    %v198 = vld [vmem:[%s194 + $0x18] sm:$0xff]
    %v199 = vld [vmem:[%s194 + $0x20] sm:$0xff]
    %v200 = vld [vmem:[%s194 + $0x28] sm:$0xff]
    %v201 = vld [vmem:[%s194 + $0x30] sm:$0xff]
    %v202 = vld [vmem:[%s194 + $0x38] sm:$0xff]
    %v203 = vld [vmem:[%s194 + $0x40] sm:$0xff]
    %v204 = vld [vmem:[%s194 + $0x48] sm:$0xff]
    %v205 = vld [vmem:[%s194 + $0x50] sm:$0xff]
    %v206 = vld [vmem:[%s194 + $0x58] sm:$0xff]
    %v207 = vld [vmem:[%s194 + $0x60] sm:$0xff]
    %v208 = vld [vmem:[%s194 + $0x68] sm:$0xff]
    %v209 = vld [vmem:[%s194 + $0x70] sm:$0xff]
    %v210 = vld [vmem:[%s194 + $0x78] sm:$0xff]
    %v211 = vld [vmem:[%s194 + $0x80] sm:$0xff]
    %v212 = vld [vmem:[%s194 + $0x88] sm:$0xff]
    %v213 = vld [vmem:[%s194 + $0x90] sm:$0xff]
    %v214 = vld [vmem:[%s194 + $0x98] sm:$0xff]
    %v215 = vld [vmem:[%s194 + $0xa0] sm:$0xff]
    %v216 = vld [vmem:[%s194 + $0xa8] sm:$0xff]
    %v217 = vld [vmem:[%s194 + $0xb0] sm:$0xff]
    %v218 = vld [vmem:[%s194 + $0xb8] sm:$0xff]
    %v219 = vld [vmem:[%s194 + $0xc0] sm:$0xff]
    %v220 = vld [vmem:[%s194 + $0xc8] sm:$0xff]
    %v221 = vld [vmem:[%s194 + $0xd0] sm:$0xff]
    %v222 = vld [vmem:[%s194 + $0xd8] sm:$0xff]
    %v223 = vld [vmem:[%s194 + $0xe0] sm:$0xff]
    %v224 = vld [vmem:[%s194 + $0xe8] sm:$0xff]
    %v225 = vld [vmem:[%s194 + $0xf0] sm:$0xff]
    %v226 = vld [vmem:[%s194 + $0xf8] sm:$0xff]
    %227 = vmatprep.subr.mxu0 %v196
    %228 = vmatpush1.msra.mxu0 %v195
    %229 = vmatprep.subr.mxu0 %v198
    %230 = vmatpush1.msra.mxu0 %v197
    %231 = vmatprep.subr.mxu0 %v200
    %232 = vmatpush1.msra.mxu0 %v199
    %233 = vmatprep.subr.mxu0 %v202
    %234 = vmatpush1.msra.mxu0 %v201
    %235 = vmatprep.subr.mxu0 %v204
    %236 = vmatpush1.msra.mxu0 %v203
    %237 = vmatprep.subr.mxu0 %v206
    %238 = vmatpush1.msra.mxu0 %v205
    %239 = vmatprep.subr.mxu0 %v208
    %240 = vmatpush1.msra.mxu0 %v207
    %241 = vmatprep.subr.mxu0 %v210
    %242 = vmatpush1.msra.mxu0 %v209
    %243 = vmatprep.subr.mxu0 %v212
    %244 = vmatpush1.msra.mxu0 %v211
    %245 = vmatprep.subr.mxu0 %v214
    %246 = vmatpush1.msra.mxu0 %v213
    %247 = vmatprep.subr.mxu0 %v216
    %248 = vmatpush1.msra.mxu0 %v215
    %249 = vmatprep.subr.mxu0 %v218
    %250 = vmatpush1.msra.mxu0 %v217
    %251 = vmatprep.subr.mxu0 %v220
    %252 = vmatpush1.msra.mxu0 %v219
    %253 = vmatprep.subr.mxu0 %v222
    %254 = vmatpush1.msra.mxu0 %v221
    %255 = vmatprep.subr.mxu0 %v224
    %256 = vmatpush1.msra.mxu0 %v223
    %257 = vmatprep.subr.mxu0 %v226
    %258 = vmatpush1.msra.mxu0 %v225
    %259 = vmatprep.subr.mxu0 0.0
    %260 = vmatpush1.msra.mxu0 0.0
    %261 = vmatprep.subr.mxu0 0.0
    %262 = vmatpush1.msra.mxu0 0.0
    %263 = vmatprep.subr.mxu0 0.0
    %264 = vmatpush1.msra.mxu0 0.0
    %265 = vmatprep.subr.mxu0 0.0
    %266 = vmatpush1.msra.mxu0 0.0
    %267 = vmatprep.subr.mxu0 0.0
    %268 = vmatpush1.msra.mxu0 0.0
    %269 = vmatprep.subr.mxu0 0.0
    %270 = vmatpush1.msra.mxu0 0.0
    %271 = vmatprep.subr.mxu0 0.0
    %272 = vmatpush1.msra.mxu0 0.0
    %273 = vmatprep.subr.mxu0 0.0
    %274 = vmatpush1.msra.mxu0 0.0
    %275 = vmatprep.subr.mxu0 0.0
    %276 = vmatpush1.msra.mxu0 0.0
    %277 = vmatprep.subr.mxu0 0.0
    %278 = vmatpush1.msra.mxu0 0.0
    %279 = vmatprep.subr.mxu0 0.0
    %280 = vmatpush1.msra.mxu0 0.0
    %281 = vmatprep.subr.mxu0 0.0
    %282 = vmatpush1.msra.mxu0 0.0
    %283 = vmatprep.subr.mxu0 0.0
    %284 = vmatpush1.msra.mxu0 0.0
    %285 = vmatprep.subr.mxu0 0.0
    %286 = vmatpush1.msra.mxu0 0.0
    %287 = vmatprep.subr.mxu0 0.0
    %288 = vmatpush1.msra.mxu0 0.0
    %289 = vmatprep.subr.mxu0 0.0
    %290 = vmatpush1.msra.mxu0 0.0
    %291 = vmatprep.mubr.f32.mxu0 0.0
    %292 = vmatmul.mubr.f32.gmra.mrb[0].mxu0 %v186
    %v293 = vpop.f32.mrb[0].mxu0
    %v294 = vadd.f32 0.0, %v293
    %v295 = vpop.f32.mrb[0].mxu0
    %v296 = vadd.f32 0.0, %v295
    %297 = vmatprep.mubr.f32.mxu0 0.0
    %298 = vmatmul.mubr.f32.gmra.mrb[0].mxu0 %v191
    %v299 = vpop.f32.mrb[0].mxu0
    %v300 = vadd.f32 0.0, %v299
    %v301 = vpop.f32.mrb[0].mxu0
    %v302 = vadd.f32 0.0, %v301
    %303 = vdwg.mxu0
    %304 = vmatprep.subr.mxu0 %v79
    %305 = vmatpush1.msra.mxu0 %v78
    %306 = vmatprep.subr.mxu0 %v81
    %307 = vmatpush1.msra.mxu0 %v80
    %308 = vmatprep.subr.mxu0 %v83
    %309 = vmatpush1.msra.mxu0 %v82
    %310 = vmatprep.subr.mxu0 %v85
    %311 = vmatpush1.msra.mxu0 %v84
    %312 = vmatprep.subr.mxu0 %v87
    %313 = vmatpush1.msra.mxu0 %v86
    %314 = vmatprep.subr.mxu0 %v89
    %315 = vmatpush1.msra.mxu0 %v88
    %316 = vmatprep.subr.mxu0 %v91
    %317 = vmatpush1.msra.mxu0 %v90
    %318 = vmatprep.subr.mxu0 %v93
    %319 = vmatpush1.msra.mxu0 %v92
    %320 = vmatprep.subr.mxu0 %v95
    %321 = vmatpush1.msra.mxu0 %v94
    %322 = vmatprep.subr.mxu0 %v97
    %323 = vmatpush1.msra.mxu0 %v96
    %324 = vmatprep.subr.mxu0 %v99
    %325 = vmatpush1.msra.mxu0 %v98
    %326 = vmatprep.subr.mxu0 %v101
    %327 = vmatpush1.msra.mxu0 %v100
    %328 = vmatprep.subr.mxu0 %v103
    %329 = vmatpush1.msra.mxu0 %v102
    %330 = vmatprep.subr.mxu0 %v105
    %331 = vmatpush1.msra.mxu0 %v104
    %332 = vmatprep.subr.mxu0 %v107
    %333 = vmatpush1.msra.mxu0 %v106
    %334 = vmatprep.subr.mxu0 %v109
    %335 = vmatpush1.msra.mxu0 %v108
    %336 = vmatprep.subr.mxu0 0.0
    %337 = vmatpush1.msra.mxu0 0.0
    %338 = vmatprep.subr.mxu0 0.0
    %339 = vmatpush1.msra.mxu0 0.0
    %340 = vmatprep.subr.mxu0 0.0
    %341 = vmatpush1.msra.mxu0 0.0
    %342 = vmatprep.subr.mxu0 0.0
    %343 = vmatpush1.msra.mxu0 0.0
    %344 = vmatprep.subr.mxu0 0.0
    %345 = vmatpush1.msra.mxu0 0.0
    %346 = vmatprep.subr.mxu0 0.0
    %347 = vmatpush1.msra.mxu0 0.0
    %348 = vmatprep.subr.mxu0 0.0
    %349 = vmatpush1.msra.mxu0 0.0
    %350 = vmatprep.subr.mxu0 0.0
    %351 = vmatpush1.msra.mxu0 0.0
    %352 = vmatprep.subr.mxu0 0.0
    %353 = vmatpush1.msra.mxu0 0.0
    %354 = vmatprep.subr.mxu0 0.0
    %355 = vmatpush1.msra.mxu0 0.0
    %356 = vmatprep.subr.mxu0 0.0
    %357 = vmatpush1.msra.mxu0 0.0
    %358 = vmatprep.subr.mxu0 0.0
    %359 = vmatpush1.msra.mxu0 0.0
    %360 = vmatprep.subr.mxu0 0.0
    %361 = vmatpush1.msra.mxu0 0.0
    %362 = vmatprep.subr.mxu0 0.0
    %363 = vmatpush1.msra.mxu0 0.0
    %364 = vmatprep.subr.mxu0 0.0
    %365 = vmatpush1.msra.mxu0 0.0
    %366 = vmatprep.subr.mxu0 0.0
    %367 = vmatpush1.msra.mxu0 0.0
    %368 = vmatprep.mubr.f32.mxu0 0.0
    %369 = vmatmul.mubr.f32.gmra.mrb[0].mxu0 %v76
    %v370 = vpop.f32.mrb[0].mxu0
    %v371 = vadd.f32 %v294, %v370
    %v372 = vpop.f32.mrb[0].mxu0
    %v373 = vadd.f32 %v296, %v372
    %374 = vmatprep.mubr.f32.mxu0 0.0
    %375 = vmatmul.mubr.f32.gmra.mrb[0].mxu0 %v77
    %v376 = vpop.f32.mrb[0].mxu0
    %v377 = vadd.f32 %v300, %v376
    %v378 = vpop.f32.mrb[0].mxu0
    %v379 = vadd.f32 %v302, %v378
    %380 = vdwg.mxu0
    %v381 = vld [vmem:[#allocation7] sm:$0xff]
    %v382 = vld [vmem:[#allocation7 + $0x8] sm:$0xff]
    %v384 = vsel %vm112, %v381, 0
    %v387 = vsel %vm112, %v382, 0
    %389 = vmatprep.subr.mxu0 0.0
    %390 = vmatpush1.msra.mxu0 %v186
    %391 = vmatprep.subr.mxu0 0.0
    %392 = vmatpush1.msra.mxu0 %v191
    %393 = vmatprep.subr.mxu0 0.0
    %394 = vmatpush1.msra.mxu0 0.0
    %395 = vmatprep.subr.mxu0 0.0
    %396 = vmatpush1.msra.mxu0 0.0
    %397 = vmatprep.subr.mxu0 0.0
    %398 = vmatpush1.msra.mxu0 0.0
    %399 = vmatprep.subr.mxu0 0.0
    %400 = vmatpush1.msra.mxu0 0.0
    %401 = vmatprep.subr.mxu0 0.0
    %402 = vmatpush1.msra.mxu0 0.0
    %403 = vmatprep.subr.mxu0 0.0
    %404 = vmatpush1.msra.mxu0 0.0
    %405 = vmatprep.subr.mxu0 0.0
    %406 = vmatpush1.msra.mxu0 0.0
    %407 = vmatprep.subr.mxu0 0.0
    %408 = vmatpush1.msra.mxu0 0.0
    %409 = vmatprep.subr.mxu0 0.0
    %410 = vmatpush1.msra.mxu0 0.0
    %411 = vmatprep.subr.mxu0 0.0
    %412 = vmatpush1.msra.mxu0 0.0
    %413 = vmatprep.subr.mxu0 0.0
    %414 = vmatpush1.msra.mxu0 0.0
    %415 = vmatprep.subr.mxu0 0.0
    %416 = vmatpush1.msra.mxu0 0.0
    %417 = vmatprep.subr.mxu0 0.0
    %418 = vmatpush1.msra.mxu0 0.0
    %419 = vmatprep.subr.mxu0 0.0
    %420 = vmatpush1.msra.mxu0 0.0
    %421 = vmatprep.subr.mxu0 0.0
    %422 = vmatpush1.msra.mxu0 0.0
    %423 = vmatprep.subr.mxu0 0.0
    %424 = vmatpush1.msra.mxu0 0.0
    %425 = vmatprep.subr.mxu0 0.0
    %426 = vmatpush1.msra.mxu0 0.0
    %427 = vmatprep.subr.mxu0 0.0
    %428 = vmatpush1.msra.mxu0 0.0
    %429 = vmatprep.subr.mxu0 0.0
    %430 = vmatpush1.msra.mxu0 0.0
    %431 = vmatprep.subr.mxu0 0.0
    %432 = vmatpush1.msra.mxu0 0.0
    %433 = vmatprep.subr.mxu0 0.0
    %434 = vmatpush1.msra.mxu0 0.0
    %435 = vmatprep.subr.mxu0 0.0
    %436 = vmatpush1.msra.mxu0 0.0
    %437 = vmatprep.subr.mxu0 0.0
    %438 = vmatpush1.msra.mxu0 0.0
    %439 = vmatprep.subr.mxu0 0.0
    %440 = vmatpush1.msra.mxu0 0.0
    %441 = vmatprep.subr.mxu0 0.0
    %442 = vmatpush1.msra.mxu0 0.0
    %443 = vmatprep.subr.mxu0 0.0
    %444 = vmatpush1.msra.mxu0 0.0
    %445 = vmatprep.subr.mxu0 0.0
    %446 = vmatpush1.msra.mxu0 0.0
    %447 = vmatprep.subr.mxu0 0.0
    %448 = vmatpush1.msra.mxu0 0.0
    %449 = vmatprep.subr.mxu0 0.0
    %450 = vmatpush1.msra.mxu0 0.0
    %451 = vmatprep.subr.mxu0 0.0
    %452 = vmatpush1.msra.mxu0 0.0
    %453 = vmatprep.mubr.f32.mxu0 0.0
    %454 = vmatmul.mubr.f32.gmra.mrb[0].mxu0 %v384
    %v455 = vpop.f32.mrb[0].mxu0
    %v456 = vadd.f32 0.0, %v455
    %v457 = vpop.f32.mrb[0].mxu0
    %458 = vmatprep.mubr.f32.mxu0 0.0
    %459 = vmatmul.mubr.f32.gmra.mrb[0].mxu0 %v387
    %v460 = vpop.f32.mrb[0].mxu0
    %v461 = vadd.f32 0.0, %v460
    %v462 = vpop.f32.mrb[0].mxu0
    %463 = vdwg.mxu0
    %v464 = vsub.f32 %v456, %v76
    %v465 = vsub.f32 %v461, %v77
    %s466 = scalar_lea.vmem [#allocation8], 512
    %v467 = vld [vmem:[%s466] sm:$0xff]
    %v468 = vld [vmem:[%s466 + $0x8] sm:$0xff]
    %v469 = vld [vmem:[%s466 + $0x10] sm:$0xff]
    %v470 = vld [vmem:[%s466 + $0x18] sm:$0xff]
    %v471 = vld [vmem:[%s466 + $0x20] sm:$0xff]
    %v472 = vld [vmem:[%s466 + $0x28] sm:$0xff]
    %v473 = vld [vmem:[%s466 + $0x30] sm:$0xff]
    %v474 = vld [vmem:[%s466 + $0x38] sm:$0xff]
    %v475 = vld [vmem:[%s466 + $0x40] sm:$0xff]
    %v476 = vld [vmem:[%s466 + $0x48] sm:$0xff]
    %v477 = vld [vmem:[%s466 + $0x50] sm:$0xff]
    %v478 = vld [vmem:[%s466 + $0x58] sm:$0xff]
    %v479 = vld [vmem:[%s466 + $0x60] sm:$0xff]
    %v480 = vld [vmem:[%s466 + $0x68] sm:$0xff]
    %v481 = vld [vmem:[%s466 + $0x70] sm:$0xff]
    %v482 = vld [vmem:[%s466 + $0x78] sm:$0xff]
    %v483 = vld [vmem:[%s466 + $0x80] sm:$0xff]
    %v484 = vld [vmem:[%s466 + $0x88] sm:$0xff]
    %v485 = vld [vmem:[%s466 + $0x90] sm:$0xff]
    %v486 = vld [vmem:[%s466 + $0x98] sm:$0xff]
    %v487 = vld [vmem:[%s466 + $0xa0] sm:$0xff]
    %v488 = vld [vmem:[%s466 + $0xa8] sm:$0xff]
    %v489 = vld [vmem:[%s466 + $0xb0] sm:$0xff]
    %v490 = vld [vmem:[%s466 + $0xb8] sm:$0xff]
    %v491 = vld [vmem:[%s466 + $0xc0] sm:$0xff]
    %v492 = vld [vmem:[%s466 + $0xc8] sm:$0xff]
    %v493 = vld [vmem:[%s466 + $0xd0] sm:$0xff]
    %v494 = vld [vmem:[%s466 + $0xd8] sm:$0xff]
    %v495 = vld [vmem:[%s466 + $0xe0] sm:$0xff]
    %v496 = vld [vmem:[%s466 + $0xe8] sm:$0xff]
    %v497 = vld [vmem:[%s466 + $0xf0] sm:$0xff]
    %v498 = vld [vmem:[%s466 + $0xf8] sm:$0xff]
    %499 = vmatprep.subr.mxu0 %v468
    %500 = vmatpush1.msra.mxu0 %v467
    %501 = vmatprep.subr.mxu0 %v470
    %502 = vmatpush1.msra.mxu0 %v469
    %503 = vmatprep.subr.mxu0 %v472
    %504 = vmatpush1.msra.mxu0 %v471
    %505 = vmatprep.subr.mxu0 %v474
    %506 = vmatpush1.msra.mxu0 %v473
    %507 = vmatprep.subr.mxu0 %v476
    %508 = vmatpush1.msra.mxu0 %v475
    %509 = vmatprep.subr.mxu0 %v478
    %510 = vmatpush1.msra.mxu0 %v477
    %511 = vmatprep.subr.mxu0 %v480
    %512 = vmatpush1.msra.mxu0 %v479
    %513 = vmatprep.subr.mxu0 %v482
    %514 = vmatpush1.msra.mxu0 %v481
    %515 = vmatprep.subr.mxu0 %v484
    %516 = vmatpush1.msra.mxu0 %v483
    %517 = vmatprep.subr.mxu0 %v486
    %518 = vmatpush1.msra.mxu0 %v485
    %519 = vmatprep.subr.mxu0 %v488
    %520 = vmatpush1.msra.mxu0 %v487
    %521 = vmatprep.subr.mxu0 %v490
    %522 = vmatpush1.msra.mxu0 %v489
    %523 = vmatprep.subr.mxu0 %v492
    %524 = vmatpush1.msra.mxu0 %v491
    %525 = vmatprep.subr.mxu0 %v494
    %526 = vmatpush1.msra.mxu0 %v493
    %527 = vmatprep.subr.mxu0 %v496
    %528 = vmatpush1.msra.mxu0 %v495
    %529 = vmatprep.subr.mxu0 %v498
    %530 = vmatpush1.msra.mxu0 %v497
    %531 = vmatprep.subr.mxu0 0.0
    %532 = vmatpush1.msra.mxu0 0.0
    %533 = vmatprep.subr.mxu0 0.0
    %534 = vmatpush1.msra.mxu0 0.0
    %535 = vmatprep.subr.mxu0 0.0
    %536 = vmatpush1.msra.mxu0 0.0
    %537 = vmatprep.subr.mxu0 0.0
    %538 = vmatpush1.msra.mxu0 0.0
    %539 = vmatprep.subr.mxu0 0.0
    %540 = vmatpush1.msra.mxu0 0.0
    %541 = vmatprep.subr.mxu0 0.0
    %542 = vmatpush1.msra.mxu0 0.0
    %543 = vmatprep.subr.mxu0 0.0
    %544 = vmatpush1.msra.mxu0 0.0
    %545 = vmatprep.subr.mxu0 0.0
    %546 = vmatpush1.msra.mxu0 0.0
    %547 = vmatprep.subr.mxu0 0.0
    %548 = vmatpush1.msra.mxu0 0.0
    %549 = vmatprep.subr.mxu0 0.0
    %550 = vmatpush1.msra.mxu0 0.0
    %551 = vmatprep.subr.mxu0 0.0
    %552 = vmatpush1.msra.mxu0 0.0
    %553 = vmatprep.subr.mxu0 0.0
    %554 = vmatpush1.msra.mxu0 0.0
    %555 = vmatprep.subr.mxu0 0.0
    %556 = vmatpush1.msra.mxu0 0.0
    %557 = vmatprep.subr.mxu0 0.0
    %558 = vmatpush1.msra.mxu0 0.0
    %559 = vmatprep.subr.mxu0 0.0
    %560 = vmatpush1.msra.mxu0 0.0
    %561 = vmatprep.subr.mxu0 0.0
    %562 = vmatpush1.msra.mxu0 0.0
    %563 = vmatprep.mubr.f32.mxu0 0.0
    %564 = vmatmul.mubr.f32.gmra.mrb[0].mxu0 %v464
    %v565 = vpop.f32.mrb[0].mxu0
    %v566 = vadd.f32 0.0, %v565
    %v567 = vpop.f32.mrb[0].mxu0
    %v568 = vadd.f32 0.0, %v567
    %569 = vmatprep.mubr.f32.mxu0 0.0
    %570 = vmatmul.mubr.f32.gmra.mrb[0].mxu0 %v465
    %v571 = vpop.f32.mrb[0].mxu0
    %v572 = vadd.f32 0.0, %v571
    %v573 = vpop.f32.mrb[0].mxu0
    %v574 = vadd.f32 0.0, %v573
    %575 = vdwg.mxu0
    %v576 = vadd.f32 %v371, %v566
    %v577 = vadd.f32 %v373, %v568
    %v578 = vadd.f32 %v377, %v572
    %v579 = vadd.f32 %v379, %v574
    %v580 = vld [vmem:[%s4] sm:$0x3]
    %v582 = vlaneseq
    %v583 = vshrl.u32 %v582, 7
    %v584 = vsub.s32 0, %v583
    %v585 = vrot.slane %v580, %v584
    %v586 = vlaneseq
    %v587 = vshrl.u32 %v586, 7
    %v588 = vsub.s32 1, %v587
    %v589 = vrot.slane %v580, %v588
    %v592 = vadd.f32 %v576, %v585
    %v593 = vadd.f32 %v577, %v589
    %v594 = vadd.f32 %v578, %v585
    %v595 = vadd.f32 %v579, %v589
    %596 = vst [vmem:[#allocation10] sm:$0xff] %v592
    %597 = vst [vmem:[#allocation10 + $0x8] sm:$0xff] %v593
    %598 = vst [vmem:[#allocation10 + $0x10] sm:$0xff] %v594
    %599 = vst [vmem:[#allocation10 + $0x18] sm:$0xff] %v595
    // Predicated region
    $region38: #{tpu_custom_call.1} parent=1 // pred_check
      _
    $region39: #{tpu_custom_call.1} parent=1 // pred_check_branch
      %601 = sbr.rel (0) target = $region41
    $region40: #{tpu_custom_call.1} parent=1 // pred_region
      %s603 = ssub.s32 512, 512
      %604 = vsyncadd [#allocation4], %s603
      %s605 = sshll.u32 [#allocation10], 4
      %s606 = int_to_ptr.vmem [resolvable:$true] %s605
      %611 = dma.vmem_to_hbm [thread:$0]  %s606, 512, %s5, [#allocation4], 256, 256, 16
    $region41: #{tpu_custom_call.1} parent=1 // pred_fallthru
      _
    // Predicated region
    $region42: #{tpu_custom_call.1} parent=1 // pred_check
      _
    $region43: #{tpu_custom_call.1} parent=1 // pred_check_branch
      %613 = sbr.rel (0) target = $region45
    $region44: #{tpu_custom_call.1} parent=1 // pred_region
      %614 = dma.done [#allocation4], 512
    $region45: #{tpu_custom_call.1} parent=1 // pred_fallthru
      _
    %615 = vsyncpa [#allocation3], 1
    %616 = vsyncpa [#allocation6], 1
    %617 = vsyncpa [#allocation9], 1
    %618 = vsyncpa [#allocation4], 1

</llo_original>
